<compile_context>
chip_gen: v7x
topology: tpu7x:2x2x1
jax: 0.10.0
libtpu: 0.0.40
codegen_flags: <defaults>
</compile_context>

<pallas_src>
import functools

import jax
import jax.numpy as jnp
from jax.experimental import pallas as pl
from jax.experimental.pallas import tpu as pltpu  # noqa: F401  (not required here)

# ----- hyperparameters (stand-in for `hp` in the reference module) -----------
INPUT_SIZE = 4
HIDDEN_SIZE = 32
NUM_LAYERS = 2
SEQ_LEN = 8
BATCH = 2
N_FUTURE_STEPS = 4
N_INPUT_FEATURES = 4
OUT_FEATURES = N_FUTURE_STEPS * N_INPUT_FEATURES


def _full_spec(shape):
    """BlockSpec covering the whole (small) array — lives entirely in VMEM."""
    zeros = (0,) * len(shape)
    return pl.BlockSpec(shape, lambda: zeros)


# ------------------------- fused forward-pass kernel -------------------------
def _fused_lstm_kernel(*refs, seq_len, batch, hidden, num_layers):
    """Whole forward pass in one invocation (no grid).

    refs = (x_flat, [w_ih_t, w_hh_t, bias] * num_layers, w_lin_t, b_lin, out)
    x_flat is time-major and flattened: row t*batch + b == x[b, t, :].
    """
    x_ref = refs[0]
    w_lin_ref = refs[1 + 3 * num_layers]
    b_lin_ref = refs[2 + 3 * num_layers]
    out_ref = refs[3 + 3 * num_layers]

    T, B, H = seq_len, batch, hidden
    h = None
    seq = None  # per-step (B, H) hidden states of the layer below (SSA values)

    for layer in range(num_layers):
        w_ih = refs[1 + 3 * layer][...]   # (F_in, 4H)
        w_hh = refs[2 + 3 * layer][...]   # (H, 4H)
        bias = refs[3 + 3 * layer][...]   # (1, 4H)

        if layer == 0:
            # Batched input projection for all T steps in one MXU matmul;
            # bias folded in once (off the critical path).
            xg = jnp.dot(x_ref[...], w_ih,
                         preferred_element_type=jnp.float32) + bias  # (T*B, 4H)
        else:
            # Hoist the loop-invariant bias broadcast above the time loop.
            bias_b = jnp.broadcast_to(bias, (B, 4 * H))

        h = None
        c = None
        new_seq = []
        for t in range(T):  # static T -> fully unrolled at trace time
            if layer == 0:
                gate_x = xg[t * B:(t + 1) * B, :]
            else:
                gate_x = (jnp.dot(seq[t], w_ih,
                                  preferred_element_type=jnp.float32) + bias_b)

            if t == 0:
                # h0 == 0: skip the recurrent matmul entirely.
                gates = gate_x
            else:
                gates = gate_x + jnp.dot(h, w_hh,
                                         preferred_element_type=jnp.float32)

            # PyTorch gate order: [i, f, g, o].  Apply transcendentals only to
            # the lanes that need them (halves EUP work on the critical path).
            i_f = jax.nn.sigmoid(gates[:, 0:2 * H])
            g_g = jnp.tanh(gates[:, 2 * H:3 * H])
            o_g = jax.nn.sigmoid(gates[:, 3 * H:4 * H])
            i_g = i_f[:, 0:H]
            f_g = i_f[:, H:2 * H]

            if t == 0:
                c = i_g * g_g            # c0 == 0: f*c term vanishes
            else:
                c = f_g * c + i_g * g_g
            h = o_g * jnp.tanh(c)

            if layer < num_layers - 1:
                new_seq.append(h)
        seq = new_seq

    # Final Linear on the top layer's last-step hidden state (output[:, -1, :]).
    out = (jnp.dot(h, w_lin_ref[...], preferred_element_type=jnp.float32)
           + b_lin_ref[...])
    out_ref[...] = out.astype(out_ref.dtype)


# --------------------------------- wrapper -----------------------------------
@jax.jit
def lstm_forward(params, x_btf):
    """x_btf: (B, T, input_size) -> (B, N_FUTURE_STEPS, N_INPUT_FEATURES)."""
    B, T, I = x_btf.shape
    H = params["lstm"][0]["w_hh_t"].shape[0]
    num_layers = len(params["lstm"])
    f_out = params["linear"]["w_t"].shape[1]

    # Time-major and flattened so the layer-0 input projection is one matmul.
    x_flat = jnp.transpose(x_btf, (1, 0, 2)).reshape(T * B, I).astype(jnp.float32)

    inputs = [x_flat]
    in_specs = [_full_spec((T * B, I))]
    for lp in params["lstm"]:
        for name in ("w_ih_t", "w_hh_t", "bias"):
            inputs.append(lp[name])
            in_specs.append(_full_spec(lp[name].shape))
    inputs.append(params["linear"]["w_t"])
    in_specs.append(_full_spec(params["linear"]["w_t"].shape))
    inputs.append(params["linear"]["bias"])
    in_specs.append(_full_spec(params["linear"]["bias"].shape))

    kernel = functools.partial(_fused_lstm_kernel, seq_len=T, batch=B,
                               hidden=H, num_layers=num_layers)

    out = pl.pallas_call(
        kernel,
        out_shape=jax.ShapeDtypeStruct((B, f_out), jnp.float32),
        in_specs=in_specs,
        out_specs=_full_spec((B, f_out)),
    )(*inputs)
    return out.reshape(B, N_FUTURE_STEPS, N_INPUT_FEATURES)


# ------------------------------ params & reference ---------------------------
def init_params(key):
    """Deterministic synthetic parameters matching nn.LSTM / nn.Linear shapes."""
    params = {"lstm": [], "linear": {}}
    scale = 1.0 / jnp.sqrt(HIDDEN_SIZE)
    for layer in range(NUM_LAYERS):
        in_f = INPUT_SIZE if layer == 0 else HIDDEN_SIZE
        key, k1, k2, k3, k4 = jax.random.split(key, 5)
        w_ih = jax.random.uniform(k1, (4 * HIDDEN_SIZE, in_f), jnp.float32,
                                  -scale, scale)
        w_hh = jax.random.uniform(k2, (4 * HIDDEN_SIZE, HIDDEN_SIZE),
                                  jnp.float32, -scale, scale)
        b_ih = jax.random.uniform(k3, (4 * HIDDEN_SIZE,), jnp.float32,
                                  -scale, scale)
        b_hh = jax.random.uniform(k4, (4 * HIDDEN_SIZE,), jnp.float32,
                                  -scale, scale)
        params["lstm"].append({
            "w_ih_t": w_ih.T,                    # (in_f, 4H)
            "w_hh_t": w_hh.T,                    # (H, 4H)
            "bias": (b_ih + b_hh)[None, :],      # (1, 4H)
        })
    key, k1, k2 = jax.random.split(key, 3)
    lin_scale = 1.0 / jnp.sqrt(HIDDEN_SIZE)
    w_lin = jax.random.uniform(k1, (OUT_FEATURES, HIDDEN_SIZE), jnp.float32,
                               -lin_scale, lin_scale)
    b_lin = jax.random.uniform(k2, (OUT_FEATURES,), jnp.float32,
                               -lin_scale, lin_scale)
    params["linear"] = {"w_t": w_lin.T, "bias": b_lin[None, :]}
    return params


def lstm_reference(params, x_btf):
    """Pure-jnp reference implementing the same nn.LSTM + Linear forward."""
    x = x_btf.astype(jnp.float32)
    B, T, _ = x.shape
    layer_in = x
    for lp in params["lstm"]:
        H = lp["w_hh_t"].shape[0]
        h = jnp.zeros((B, H), jnp.float32)
        c = jnp.zeros((B, H), jnp.float32)
        outs = []
        for t in range(T):
            gates = (layer_in[:, t, :] @ lp["w_ih_t"]
                     + h @ lp["w_hh_t"] + lp["bias"])
            i_g = jax.nn.sigmoid(gates[:, 0 * H:1 * H])
            f_g = jax.nn.sigmoid(gates[:, 1 * H:2 * H])
            g_g = jnp.tanh(gates[:, 2 * H:3 * H])
            o_g = jax.nn.sigmoid(gates[:, 3 * H:4 * H])
            c = f_g * c + i_g * g_g
            h = o_g * jnp.tanh(c)
            outs.append(h)
        layer_in = jnp.stack(outs, axis=1)  # (B, T, H)
    y = layer_in[:, -1, :] @ params["linear"]["w_t"] + params["linear"]["bias"]
    return y.reshape(-1, N_FUTURE_STEPS, N_INPUT_FEATURES)


if __name__ == "__main__":
    key = jax.random.PRNGKey(0)
    k_param, k_x = jax.random.split(key)
    params = init_params(k_param)
    x = jax.random.normal(k_x, (BATCH, SEQ_LEN, INPUT_SIZE), jnp.float32)

    out = lstm_forward(params, x)
    jax.block_until_ready(out)
    assert out.shape == (BATCH, N_FUTURE_STEPS, N_INPUT_FEATURES)

    ref = lstm_reference(params, x)
    assert jnp.allclose(out, ref, atol=2e-2, rtol=2e-2), (
        f"mismatch, max abs diff = {jnp.max(jnp.abs(out - ref))}")
    print("KERNEL_OK")
</pallas_src>

<mosaic_0001>
module attributes {stable_mosaic.version = 11 : i64} {
  func.func @_fused_lstm_kernel(%arg0: memref<16x4xf32, #tpu.memory_space<vmem>>, %arg1: memref<4x128xf32, #tpu.memory_space<vmem>>, %arg2: memref<32x128xf32, #tpu.memory_space<vmem>>, %arg3: memref<1x128xf32, #tpu.memory_space<vmem>>, %arg4: memref<32x128xf32, #tpu.memory_space<vmem>>, %arg5: memref<32x128xf32, #tpu.memory_space<vmem>>, %arg6: memref<1x128xf32, #tpu.memory_space<vmem>>, %arg7: memref<32x16xf32, #tpu.memory_space<vmem>>, %arg8: memref<1x16xf32, #tpu.memory_space<vmem>>, %arg9: memref<2x16xf32, #tpu.memory_space<vmem>>) attributes {dimension_semantics = [], scalar_prefetch = 0 : i64, scratch_operands = 0 : i64, tpu.core_type = #tpu.core_type<tc>} {
    %c0 = arith.constant 0 : index
    %c0_0 = arith.constant 0 : index
    %0 = vector.load %arg1[%c0, %c0_0] : memref<4x128xf32, #tpu.memory_space<vmem>>, vector<4x128xf32>
    %c0_1 = arith.constant 0 : index
    %c0_2 = arith.constant 0 : index
    %1 = vector.load %arg2[%c0_1, %c0_2] : memref<32x128xf32, #tpu.memory_space<vmem>>, vector<32x128xf32>
    %c0_3 = arith.constant 0 : index
    %c0_4 = arith.constant 0 : index
    %2 = vector.load %arg3[%c0_3, %c0_4] : memref<1x128xf32, #tpu.memory_space<vmem>>, vector<1x128xf32>
    %c0_5 = arith.constant 0 : index
    %c0_6 = arith.constant 0 : index
    %3 = vector.load %arg0[%c0_5, %c0_6] : memref<16x4xf32, #tpu.memory_space<vmem>>, vector<16x4xf32>
    %cst = arith.constant dense<0.000000e+00> : vector<16x128xf32>
    %4 = tpu.matmul %3, %0, %cst {dimension_numbers = #tpu.dot_dimension_numbers<[1], [0], [0], [1], [0, 0, 1, 1], [], []>} : vector<16x4xf32>, vector<4x128xf32>, vector<16x128xf32> -> vector<16x128xf32>
    %5 = vector.broadcast %2 : vector<1x128xf32> to vector<16x128xf32>
    %6 = arith.addf %4, %5 : vector<16x128xf32>
    %7 = vector.extract_strided_slice %6 {offsets = [0, 0], sizes = [2, 128], strides = [1, 1]} : vector<16x128xf32> to vector<2x128xf32>
    %8 = vector.extract_strided_slice %7 {offsets = [0, 0], sizes = [2, 64], strides = [1, 1]} : vector<2x128xf32> to vector<2x64xf32>
    %9 = arith.negf %8 : vector<2x64xf32>
    %10 = math.exp %9 : vector<2x64xf32>
    %cst_7 = arith.constant 1.000000e+00 : f32
    %11 = vector.broadcast %cst_7 : f32 to vector<2x64xf32>
    %12 = arith.addf %11, %10 : vector<2x64xf32>
    %13 = arith.divf %11, %12 : vector<2x64xf32>
    %14 = vector.extract_strided_slice %7 {offsets = [0, 64], sizes = [2, 32], strides = [1, 1]} : vector<2x128xf32> to vector<2x32xf32>
    %15 = math.tanh %14 : vector<2x32xf32>
    %16 = vector.extract_strided_slice %7 {offsets = [0, 96], sizes = [2, 32], strides = [1, 1]} : vector<2x128xf32> to vector<2x32xf32>
    %17 = arith.negf %16 : vector<2x32xf32>
    %18 = math.exp %17 : vector<2x32xf32>
    %cst_8 = arith.constant 1.000000e+00 : f32
    %19 = vector.broadcast %cst_8 : f32 to vector<2x32xf32>
    %20 = arith.addf %19, %18 : vector<2x32xf32>
    %21 = arith.divf %19, %20 : vector<2x32xf32>
    %22 = vector.extract_strided_slice %13 {offsets = [0, 0], sizes = [2, 32], strides = [1, 1]} : vector<2x64xf32> to vector<2x32xf32>
    %23 = arith.mulf %22, %15 : vector<2x32xf32>
    %24 = math.tanh %23 : vector<2x32xf32>
    %25 = arith.mulf %21, %24 : vector<2x32xf32>
    %26 = vector.extract_strided_slice %6 {offsets = [2, 0], sizes = [2, 128], strides = [1, 1]} : vector<16x128xf32> to vector<2x128xf32>
    %cst_9 = arith.constant dense<0.000000e+00> : vector<2x128xf32>
    %27 = tpu.matmul %25, %1, %cst_9 {dimension_numbers = #tpu.dot_dimension_numbers<[1], [0], [0], [1], [0, 0, 1, 1], [], []>} : vector<2x32xf32>, vector<32x128xf32>, vector<2x128xf32> -> vector<2x128xf32>
    %28 = arith.addf %26, %27 : vector<2x128xf32>
    %29 = vector.extract_strided_slice %28 {offsets = [0, 0], sizes = [2, 64], strides = [1, 1]} : vector<2x128xf32> to vector<2x64xf32>
    %30 = arith.negf %29 : vector<2x64xf32>
    %31 = math.exp %30 : vector<2x64xf32>
    %cst_10 = arith.constant 1.000000e+00 : f32
    %32 = vector.broadcast %cst_10 : f32 to vector<2x64xf32>
    %33 = arith.addf %32, %31 : vector<2x64xf32>
    %34 = arith.divf %32, %33 : vector<2x64xf32>
    %35 = vector.extract_strided_slice %28 {offsets = [0, 64], sizes = [2, 32], strides = [1, 1]} : vector<2x128xf32> to vector<2x32xf32>
    %36 = math.tanh %35 : vector<2x32xf32>
    %37 = vector.extract_strided_slice %28 {offsets = [0, 96], sizes = [2, 32], strides = [1, 1]} : vector<2x128xf32> to vector<2x32xf32>
    %38 = arith.negf %37 : vector<2x32xf32>
    %39 = math.exp %38 : vector<2x32xf32>
    %cst_11 = arith.constant 1.000000e+00 : f32
    %40 = vector.broadcast %cst_11 : f32 to vector<2x32xf32>
    %41 = arith.addf %40, %39 : vector<2x32xf32>
    %42 = arith.divf %40, %41 : vector<2x32xf32>
    %43 = vector.extract_strided_slice %34 {offsets = [0, 0], sizes = [2, 32], strides = [1, 1]} : vector<2x64xf32> to vector<2x32xf32>
    %44 = vector.extract_strided_slice %34 {offsets = [0, 32], sizes = [2, 32], strides = [1, 1]} : vector<2x64xf32> to vector<2x32xf32>
    %45 = arith.mulf %44, %23 : vector<2x32xf32>
    %46 = arith.mulf %43, %36 : vector<2x32xf32>
    %47 = arith.addf %45, %46 : vector<2x32xf32>
    %48 = math.tanh %47 : vector<2x32xf32>
    %49 = arith.mulf %42, %48 : vector<2x32xf32>
    %50 = vector.extract_strided_slice %6 {offsets = [4, 0], sizes = [2, 128], strides = [1, 1]} : vector<16x128xf32> to vector<2x128xf32>
    %cst_12 = arith.constant dense<0.000000e+00> : vector<2x128xf32>
    %51 = tpu.matmul %49, %1, %cst_12 {dimension_numbers = #tpu.dot_dimension_numbers<[1], [0], [0], [1], [0, 0, 1, 1], [], []>} : vector<2x32xf32>, vector<32x128xf32>, vector<2x128xf32> -> vector<2x128xf32>
    %52 = arith.addf %50, %51 : vector<2x128xf32>
    %53 = vector.extract_strided_slice %52 {offsets = [0, 0], sizes = [2, 64], strides = [1, 1]} : vector<2x128xf32> to vector<2x64xf32>
    %54 = arith.negf %53 : vector<2x64xf32>
    %55 = math.exp %54 : vector<2x64xf32>
    %cst_13 = arith.constant 1.000000e+00 : f32
    %56 = vector.broadcast %cst_13 : f32 to vector<2x64xf32>
    %57 = arith.addf %56, %55 : vector<2x64xf32>
    %58 = arith.divf %56, %57 : vector<2x64xf32>
    %59 = vector.extract_strided_slice %52 {offsets = [0, 64], sizes = [2, 32], strides = [1, 1]} : vector<2x128xf32> to vector<2x32xf32>
    %60 = math.tanh %59 : vector<2x32xf32>
    %61 = vector.extract_strided_slice %52 {offsets = [0, 96], sizes = [2, 32], strides = [1, 1]} : vector<2x128xf32> to vector<2x32xf32>
    %62 = arith.negf %61 : vector<2x32xf32>
    %63 = math.exp %62 : vector<2x32xf32>
    %cst_14 = arith.constant 1.000000e+00 : f32
    %64 = vector.broadcast %cst_14 : f32 to vector<2x32xf32>
    %65 = arith.addf %64, %63 : vector<2x32xf32>
    %66 = arith.divf %64, %65 : vector<2x32xf32>
    %67 = vector.extract_strided_slice %58 {offsets = [0, 0], sizes = [2, 32], strides = [1, 1]} : vector<2x64xf32> to vector<2x32xf32>
    %68 = vector.extract_strided_slice %58 {offsets = [0, 32], sizes = [2, 32], strides = [1, 1]} : vector<2x64xf32> to vector<2x32xf32>
    %69 = arith.mulf %68, %47 : vector<2x32xf32>
    %70 = arith.mulf %67, %60 : vector<2x32xf32>
    %71 = arith.addf %69, %70 : vector<2x32xf32>
    %72 = math.tanh %71 : vector<2x32xf32>
    %73 = arith.mulf %66, %72 : vector<2x32xf32>
    %74 = vector.extract_strided_slice %6 {offsets = [6, 0], sizes = [2, 128], strides = [1, 1]} : vector<16x128xf32> to vector<2x128xf32>
    %cst_15 = arith.constant dense<0.000000e+00> : vector<2x128xf32>
    %75 = tpu.matmul %73, %1, %cst_15 {dimension_numbers = #tpu.dot_dimension_numbers<[1], [0], [0], [1], [0, 0, 1, 1], [], []>} : vector<2x32xf32>, vector<32x128xf32>, vector<2x128xf32> -> vector<2x128xf32>
    %76 = arith.addf %74, %75 : vector<2x128xf32>
    %77 = vector.extract_strided_slice %76 {offsets = [0, 0], sizes = [2, 64], strides = [1, 1]} : vector<2x128xf32> to vector<2x64xf32>
    %78 = arith.negf %77 : vector<2x64xf32>
    %79 = math.exp %78 : vector<2x64xf32>
    %cst_16 = arith.constant 1.000000e+00 : f32
    %80 = vector.broadcast %cst_16 : f32 to vector<2x64xf32>
    %81 = arith.addf %80, %79 : vector<2x64xf32>
    %82 = arith.divf %80, %81 : vector<2x64xf32>
    %83 = vector.extract_strided_slice %76 {offsets = [0, 64], sizes = [2, 32], strides = [1, 1]} : vector<2x128xf32> to vector<2x32xf32>
    %84 = math.tanh %83 : vector<2x32xf32>
    %85 = vector.extract_strided_slice %76 {offsets = [0, 96], sizes = [2, 32], strides = [1, 1]} : vector<2x128xf32> to vector<2x32xf32>
    %86 = arith.negf %85 : vector<2x32xf32>
    %87 = math.exp %86 : vector<2x32xf32>
    %cst_17 = arith.constant 1.000000e+00 : f32
    %88 = vector.broadcast %cst_17 : f32 to vector<2x32xf32>
    %89 = arith.addf %88, %87 : vector<2x32xf32>
    %90 = arith.divf %88, %89 : vector<2x32xf32>
    %91 = vector.extract_strided_slice %82 {offsets = [0, 0], sizes = [2, 32], strides = [1, 1]} : vector<2x64xf32> to vector<2x32xf32>
    %92 = vector.extract_strided_slice %82 {offsets = [0, 32], sizes = [2, 32], strides = [1, 1]} : vector<2x64xf32> to vector<2x32xf32>
    %93 = arith.mulf %92, %71 : vector<2x32xf32>
    %94 = arith.mulf %91, %84 : vector<2x32xf32>
    %95 = arith.addf %93, %94 : vector<2x32xf32>
    %96 = math.tanh %95 : vector<2x32xf32>
    %97 = arith.mulf %90, %96 : vector<2x32xf32>
    %98 = vector.extract_strided_slice %6 {offsets = [8, 0], sizes = [2, 128], strides = [1, 1]} : vector<16x128xf32> to vector<2x128xf32>
    %cst_18 = arith.constant dense<0.000000e+00> : vector<2x128xf32>
    %99 = tpu.matmul %97, %1, %cst_18 {dimension_numbers = #tpu.dot_dimension_numbers<[1], [0], [0], [1], [0, 0, 1, 1], [], []>} : vector<2x32xf32>, vector<32x128xf32>, vector<2x128xf32> -> vector<2x128xf32>
    %100 = arith.addf %98, %99 : vector<2x128xf32>
    %101 = vector.extract_strided_slice %100 {offsets = [0, 0], sizes = [2, 64], strides = [1, 1]} : vector<2x128xf32> to vector<2x64xf32>
    %102 = arith.negf %101 : vector<2x64xf32>
    %103 = math.exp %102 : vector<2x64xf32>
    %cst_19 = arith.constant 1.000000e+00 : f32
    %104 = vector.broadcast %cst_19 : f32 to vector<2x64xf32>
    %105 = arith.addf %104, %103 : vector<2x64xf32>
    %106 = arith.divf %104, %105 : vector<2x64xf32>
    %107 = vector.extract_strided_slice %100 {offsets = [0, 64], sizes = [2, 32], strides = [1, 1]} : vector<2x128xf32> to vector<2x32xf32>
    %108 = math.tanh %107 : vector<2x32xf32>
    %109 = vector.extract_strided_slice %100 {offsets = [0, 96], sizes = [2, 32], strides = [1, 1]} : vector<2x128xf32> to vector<2x32xf32>
    %110 = arith.negf %109 : vector<2x32xf32>
    %111 = math.exp %110 : vector<2x32xf32>
    %cst_20 = arith.constant 1.000000e+00 : f32
    %112 = vector.broadcast %cst_20 : f32 to vector<2x32xf32>
    %113 = arith.addf %112, %111 : vector<2x32xf32>
    %114 = arith.divf %112, %113 : vector<2x32xf32>
    %115 = vector.extract_strided_slice %106 {offsets = [0, 0], sizes = [2, 32], strides = [1, 1]} : vector<2x64xf32> to vector<2x32xf32>
    %116 = vector.extract_strided_slice %106 {offsets = [0, 32], sizes = [2, 32], strides = [1, 1]} : vector<2x64xf32> to vector<2x32xf32>
    %117 = arith.mulf %116, %95 : vector<2x32xf32>
    %118 = arith.mulf %115, %108 : vector<2x32xf32>
    %119 = arith.addf %117, %118 : vector<2x32xf32>
    %120 = math.tanh %119 : vector<2x32xf32>
    %121 = arith.mulf %114, %120 : vector<2x32xf32>
    %122 = vector.extract_strided_slice %6 {offsets = [10, 0], sizes = [2, 128], strides = [1, 1]} : vector<16x128xf32> to vector<2x128xf32>
    %cst_21 = arith.constant dense<0.000000e+00> : vector<2x128xf32>
    %123 = tpu.matmul %121, %1, %cst_21 {dimension_numbers = #tpu.dot_dimension_numbers<[1], [0], [0], [1], [0, 0, 1, 1], [], []>} : vector<2x32xf32>, vector<32x128xf32>, vector<2x128xf32> -> vector<2x128xf32>
    %124 = arith.addf %122, %123 : vector<2x128xf32>
    %125 = vector.extract_strided_slice %124 {offsets = [0, 0], sizes = [2, 64], strides = [1, 1]} : vector<2x128xf32> to vector<2x64xf32>
    %126 = arith.negf %125 : vector<2x64xf32>
    %127 = math.exp %126 : vector<2x64xf32>
    %cst_22 = arith.constant 1.000000e+00 : f32
    %128 = vector.broadcast %cst_22 : f32 to vector<2x64xf32>
    %129 = arith.addf %128, %127 : vector<2x64xf32>
    %130 = arith.divf %128, %129 : vector<2x64xf32>
    %131 = vector.extract_strided_slice %124 {offsets = [0, 64], sizes = [2, 32], strides = [1, 1]} : vector<2x128xf32> to vector<2x32xf32>
    %132 = math.tanh %131 : vector<2x32xf32>
    %133 = vector.extract_strided_slice %124 {offsets = [0, 96], sizes = [2, 32], strides = [1, 1]} : vector<2x128xf32> to vector<2x32xf32>
    %134 = arith.negf %133 : vector<2x32xf32>
    %135 = math.exp %134 : vector<2x32xf32>
    %cst_23 = arith.constant 1.000000e+00 : f32
    %136 = vector.broadcast %cst_23 : f32 to vector<2x32xf32>
    %137 = arith.addf %136, %135 : vector<2x32xf32>
    %138 = arith.divf %136, %137 : vector<2x32xf32>
    %139 = vector.extract_strided_slice %130 {offsets = [0, 0], sizes = [2, 32], strides = [1, 1]} : vector<2x64xf32> to vector<2x32xf32>
    %140 = vector.extract_strided_slice %130 {offsets = [0, 32], sizes = [2, 32], strides = [1, 1]} : vector<2x64xf32> to vector<2x32xf32>
    %141 = arith.mulf %140, %119 : vector<2x32xf32>
    %142 = arith.mulf %139, %132 : vector<2x32xf32>
    %143 = arith.addf %141, %142 : vector<2x32xf32>
    %144 = math.tanh %143 : vector<2x32xf32>
    %145 = arith.mulf %138, %144 : vector<2x32xf32>
    %146 = vector.extract_strided_slice %6 {offsets = [12, 0], sizes = [2, 128], strides = [1, 1]} : vector<16x128xf32> to vector<2x128xf32>
    %cst_24 = arith.constant dense<0.000000e+00> : vector<2x128xf32>
    %147 = tpu.matmul %145, %1, %cst_24 {dimension_numbers = #tpu.dot_dimension_numbers<[1], [0], [0], [1], [0, 0, 1, 1], [], []>} : vector<2x32xf32>, vector<32x128xf32>, vector<2x128xf32> -> vector<2x128xf32>
    %148 = arith.addf %146, %147 : vector<2x128xf32>
    %149 = vector.extract_strided_slice %148 {offsets = [0, 0], sizes = [2, 64], strides = [1, 1]} : vector<2x128xf32> to vector<2x64xf32>
    %150 = arith.negf %149 : vector<2x64xf32>
    %151 = math.exp %150 : vector<2x64xf32>
    %cst_25 = arith.constant 1.000000e+00 : f32
    %152 = vector.broadcast %cst_25 : f32 to vector<2x64xf32>
    %153 = arith.addf %152, %151 : vector<2x64xf32>
    %154 = arith.divf %152, %153 : vector<2x64xf32>
    %155 = vector.extract_strided_slice %148 {offsets = [0, 64], sizes = [2, 32], strides = [1, 1]} : vector<2x128xf32> to vector<2x32xf32>
    %156 = math.tanh %155 : vector<2x32xf32>
    %157 = vector.extract_strided_slice %148 {offsets = [0, 96], sizes = [2, 32], strides = [1, 1]} : vector<2x128xf32> to vector<2x32xf32>
    %158 = arith.negf %157 : vector<2x32xf32>
    %159 = math.exp %158 : vector<2x32xf32>
    %cst_26 = arith.constant 1.000000e+00 : f32
    %160 = vector.broadcast %cst_26 : f32 to vector<2x32xf32>
    %161 = arith.addf %160, %159 : vector<2x32xf32>
    %162 = arith.divf %160, %161 : vector<2x32xf32>
    %163 = vector.extract_strided_slice %154 {offsets = [0, 0], sizes = [2, 32], strides = [1, 1]} : vector<2x64xf32> to vector<2x32xf32>
    %164 = vector.extract_strided_slice %154 {offsets = [0, 32], sizes = [2, 32], strides = [1, 1]} : vector<2x64xf32> to vector<2x32xf32>
    %165 = arith.mulf %164, %143 : vector<2x32xf32>
    %166 = arith.mulf %163, %156 : vector<2x32xf32>
    %167 = arith.addf %165, %166 : vector<2x32xf32>
    %168 = math.tanh %167 : vector<2x32xf32>
    %169 = arith.mulf %162, %168 : vector<2x32xf32>
    %170 = vector.extract_strided_slice %6 {offsets = [14, 0], sizes = [2, 128], strides = [1, 1]} : vector<16x128xf32> to vector<2x128xf32>
    %cst_27 = arith.constant dense<0.000000e+00> : vector<2x128xf32>
    %171 = tpu.matmul %169, %1, %cst_27 {dimension_numbers = #tpu.dot_dimension_numbers<[1], [0], [0], [1], [0, 0, 1, 1], [], []>} : vector<2x32xf32>, vector<32x128xf32>, vector<2x128xf32> -> vector<2x128xf32>
    %172 = arith.addf %170, %171 : vector<2x128xf32>
    %173 = vector.extract_strided_slice %172 {offsets = [0, 0], sizes = [2, 64], strides = [1, 1]} : vector<2x128xf32> to vector<2x64xf32>
    %174 = arith.negf %173 : vector<2x64xf32>
    %175 = math.exp %174 : vector<2x64xf32>
    %cst_28 = arith.constant 1.000000e+00 : f32
    %176 = vector.broadcast %cst_28 : f32 to vector<2x64xf32>
    %177 = arith.addf %176, %175 : vector<2x64xf32>
    %178 = arith.divf %176, %177 : vector<2x64xf32>
    %179 = vector.extract_strided_slice %172 {offsets = [0, 64], sizes = [2, 32], strides = [1, 1]} : vector<2x128xf32> to vector<2x32xf32>
    %180 = math.tanh %179 : vector<2x32xf32>
    %181 = vector.extract_strided_slice %172 {offsets = [0, 96], sizes = [2, 32], strides = [1, 1]} : vector<2x128xf32> to vector<2x32xf32>
    %182 = arith.negf %181 : vector<2x32xf32>
    %183 = math.exp %182 : vector<2x32xf32>
    %cst_29 = arith.constant 1.000000e+00 : f32
    %184 = vector.broadcast %cst_29 : f32 to vector<2x32xf32>
    %185 = arith.addf %184, %183 : vector<2x32xf32>
    %186 = arith.divf %184, %185 : vector<2x32xf32>
    %187 = vector.extract_strided_slice %178 {offsets = [0, 0], sizes = [2, 32], strides = [1, 1]} : vector<2x64xf32> to vector<2x32xf32>
    %188 = vector.extract_strided_slice %178 {offsets = [0, 32], sizes = [2, 32], strides = [1, 1]} : vector<2x64xf32> to vector<2x32xf32>
    %189 = arith.mulf %188, %167 : vector<2x32xf32>
    %190 = arith.mulf %187, %180 : vector<2x32xf32>
    %191 = arith.addf %189, %190 : vector<2x32xf32>
    %192 = math.tanh %191 : vector<2x32xf32>
    %193 = arith.mulf %186, %192 : vector<2x32xf32>
    %c0_30 = arith.constant 0 : index
    %c0_31 = arith.constant 0 : index
    %194 = vector.load %arg4[%c0_30, %c0_31] : memref<32x128xf32, #tpu.memory_space<vmem>>, vector<32x128xf32>
    %c0_32 = arith.constant 0 : index
    %c0_33 = arith.constant 0 : index
    %195 = vector.load %arg5[%c0_32, %c0_33] : memref<32x128xf32, #tpu.memory_space<vmem>>, vector<32x128xf32>
    %c0_34 = arith.constant 0 : index
    %c0_35 = arith.constant 0 : index
    %196 = vector.load %arg6[%c0_34, %c0_35] : memref<1x128xf32, #tpu.memory_space<vmem>>, vector<1x128xf32>
    %197 = vector.shape_cast %196 : vector<1x128xf32> to vector<1x128xf32>
    %198 = vector.broadcast %197 : vector<1x128xf32> to vector<2x128xf32>
    %cst_36 = arith.constant dense<0.000000e+00> : vector<2x128xf32>
    %199 = tpu.matmul %25, %194, %cst_36 {dimension_numbers = #tpu.dot_dimension_numbers<[1], [0], [0], [1], [0, 0, 1, 1], [], []>} : vector<2x32xf32>, vector<32x128xf32>, vector<2x128xf32> -> vector<2x128xf32>
    %200 = arith.addf %199, %198 : vector<2x128xf32>
    %201 = vector.extract_strided_slice %200 {offsets = [0, 0], sizes = [2, 64], strides = [1, 1]} : vector<2x128xf32> to vector<2x64xf32>
    %202 = arith.negf %201 : vector<2x64xf32>
    %203 = math.exp %202 : vector<2x64xf32>
    %cst_37 = arith.constant 1.000000e+00 : f32
    %204 = vector.broadcast %cst_37 : f32 to vector<2x64xf32>
    %205 = arith.addf %204, %203 : vector<2x64xf32>
    %206 = arith.divf %204, %205 : vector<2x64xf32>
    %207 = vector.extract_strided_slice %200 {offsets = [0, 64], sizes = [2, 32], strides = [1, 1]} : vector<2x128xf32> to vector<2x32xf32>
    %208 = math.tanh %207 : vector<2x32xf32>
    %209 = vector.extract_strided_slice %200 {offsets = [0, 96], sizes = [2, 32], strides = [1, 1]} : vector<2x128xf32> to vector<2x32xf32>
    %210 = arith.negf %209 : vector<2x32xf32>
    %211 = math.exp %210 : vector<2x32xf32>
    %cst_38 = arith.constant 1.000000e+00 : f32
    %212 = vector.broadcast %cst_38 : f32 to vector<2x32xf32>
    %213 = arith.addf %212, %211 : vector<2x32xf32>
    %214 = arith.divf %212, %213 : vector<2x32xf32>
    %215 = vector.extract_strided_slice %206 {offsets = [0, 0], sizes = [2, 32], strides = [1, 1]} : vector<2x64xf32> to vector<2x32xf32>
    %216 = arith.mulf %215, %208 : vector<2x32xf32>
    %217 = math.tanh %216 : vector<2x32xf32>
    %218 = arith.mulf %214, %217 : vector<2x32xf32>
    %cst_39 = arith.constant dense<0.000000e+00> : vector<2x128xf32>
    %219 = tpu.matmul %49, %194, %cst_39 {dimension_numbers = #tpu.dot_dimension_numbers<[1], [0], [0], [1], [0, 0, 1, 1], [], []>} : vector<2x32xf32>, vector<32x128xf32>, vector<2x128xf32> -> vector<2x128xf32>
    %220 = arith.addf %219, %198 : vector<2x128xf32>
    %cst_40 = arith.constant dense<0.000000e+00> : vector<2x128xf32>
    %221 = tpu.matmul %218, %195, %cst_40 {dimension_numbers = #tpu.dot_dimension_numbers<[1], [0], [0], [1], [0, 0, 1, 1], [], []>} : vector<2x32xf32>, vector<32x128xf32>, vector<2x128xf32> -> vector<2x128xf32>
    %222 = arith.addf %220, %221 : vector<2x128xf32>
    %223 = vector.extract_strided_slice %222 {offsets = [0, 0], sizes = [2, 64], strides = [1, 1]} : vector<2x128xf32> to vector<2x64xf32>
    %224 = arith.negf %223 : vector<2x64xf32>
    %225 = math.exp %224 : vector<2x64xf32>
    %cst_41 = arith.constant 1.000000e+00 : f32
    %226 = vector.broadcast %cst_41 : f32 to vector<2x64xf32>
    %227 = arith.addf %226, %225 : vector<2x64xf32>
    %228 = arith.divf %226, %227 : vector<2x64xf32>
    %229 = vector.extract_strided_slice %222 {offsets = [0, 64], sizes = [2, 32], strides = [1, 1]} : vector<2x128xf32> to vector<2x32xf32>
    %230 = math.tanh %229 : vector<2x32xf32>
    %231 = vector.extract_strided_slice %222 {offsets = [0, 96], sizes = [2, 32], strides = [1, 1]} : vector<2x128xf32> to vector<2x32xf32>
    %232 = arith.negf %231 : vector<2x32xf32>
    %233 = math.exp %232 : vector<2x32xf32>
    %cst_42 = arith.constant 1.000000e+00 : f32
    %234 = vector.broadcast %cst_42 : f32 to vector<2x32xf32>
    %235 = arith.addf %234, %233 : vector<2x32xf32>
    %236 = arith.divf %234, %235 : vector<2x32xf32>
    %237 = vector.extract_strided_slice %228 {offsets = [0, 0], sizes = [2, 32], strides = [1, 1]} : vector<2x64xf32> to vector<2x32xf32>
    %238 = vector.extract_strided_slice %228 {offsets = [0, 32], sizes = [2, 32], strides = [1, 1]} : vector<2x64xf32> to vector<2x32xf32>
    %239 = arith.mulf %238, %216 : vector<2x32xf32>
    %240 = arith.mulf %237, %230 : vector<2x32xf32>
    %241 = arith.addf %239, %240 : vector<2x32xf32>
    %242 = math.tanh %241 : vector<2x32xf32>
    %243 = arith.mulf %236, %242 : vector<2x32xf32>
    %cst_43 = arith.constant dense<0.000000e+00> : vector<2x128xf32>
    %244 = tpu.matmul %73, %194, %cst_43 {dimension_numbers = #tpu.dot_dimension_numbers<[1], [0], [0], [1], [0, 0, 1, 1], [], []>} : vector<2x32xf32>, vector<32x128xf32>, vector<2x128xf32> -> vector<2x128xf32>
    %245 = arith.addf %244, %198 : vector<2x128xf32>
    %cst_44 = arith.constant dense<0.000000e+00> : vector<2x128xf32>
    %246 = tpu.matmul %243, %195, %cst_44 {dimension_numbers = #tpu.dot_dimension_numbers<[1], [0], [0], [1], [0, 0, 1, 1], [], []>} : vector<2x32xf32>, vector<32x128xf32>, vector<2x128xf32> -> vector<2x128xf32>
    %247 = arith.addf %245, %246 : vector<2x128xf32>
    %248 = vector.extract_strided_slice %247 {offsets = [0, 0], sizes = [2, 64], strides = [1, 1]} : vector<2x128xf32> to vector<2x64xf32>
    %249 = arith.negf %248 : vector<2x64xf32>
    %250 = math.exp %249 : vector<2x64xf32>
    %cst_45 = arith.constant 1.000000e+00 : f32
    %251 = vector.broadcast %cst_45 : f32 to vector<2x64xf32>
    %252 = arith.addf %251, %250 : vector<2x64xf32>
    %253 = arith.divf %251, %252 : vector<2x64xf32>
    %254 = vector.extract_strided_slice %247 {offsets = [0, 64], sizes = [2, 32], strides = [1, 1]} : vector<2x128xf32> to vector<2x32xf32>
    %255 = math.tanh %254 : vector<2x32xf32>
    %256 = vector.extract_strided_slice %247 {offsets = [0, 96], sizes = [2, 32], strides = [1, 1]} : vector<2x128xf32> to vector<2x32xf32>
    %257 = arith.negf %256 : vector<2x32xf32>
    %258 = math.exp %257 : vector<2x32xf32>
    %cst_46 = arith.constant 1.000000e+00 : f32
    %259 = vector.broadcast %cst_46 : f32 to vector<2x32xf32>
    %260 = arith.addf %259, %258 : vector<2x32xf32>
    %261 = arith.divf %259, %260 : vector<2x32xf32>
    %262 = vector.extract_strided_slice %253 {offsets = [0, 0], sizes = [2, 32], strides = [1, 1]} : vector<2x64xf32> to vector<2x32xf32>
    %263 = vector.extract_strided_slice %253 {offsets = [0, 32], sizes = [2, 32], strides = [1, 1]} : vector<2x64xf32> to vector<2x32xf32>
    %264 = arith.mulf %263, %241 : vector<2x32xf32>
    %265 = arith.mulf %262, %255 : vector<2x32xf32>
    %266 = arith.addf %264, %265 : vector<2x32xf32>
    %267 = math.tanh %266 : vector<2x32xf32>
    %268 = arith.mulf %261, %267 : vector<2x32xf32>
    %cst_47 = arith.constant dense<0.000000e+00> : vector<2x128xf32>
    %269 = tpu.matmul %97, %194, %cst_47 {dimension_numbers = #tpu.dot_dimension_numbers<[1], [0], [0], [1], [0, 0, 1, 1], [], []>} : vector<2x32xf32>, vector<32x128xf32>, vector<2x128xf32> -> vector<2x128xf32>
    %270 = arith.addf %269, %198 : vector<2x128xf32>
    %cst_48 = arith.constant dense<0.000000e+00> : vector<2x128xf32>
    %271 = tpu.matmul %268, %195, %cst_48 {dimension_numbers = #tpu.dot_dimension_numbers<[1], [0], [0], [1], [0, 0, 1, 1], [], []>} : vector<2x32xf32>, vector<32x128xf32>, vector<2x128xf32> -> vector<2x128xf32>
    %272 = arith.addf %270, %271 : vector<2x128xf32>
    %273 = vector.extract_strided_slice %272 {offsets = [0, 0], sizes = [2, 64], strides = [1, 1]} : vector<2x128xf32> to vector<2x64xf32>
    %274 = arith.negf %273 : vector<2x64xf32>
    %275 = math.exp %274 : vector<2x64xf32>
    %cst_49 = arith.constant 1.000000e+00 : f32
    %276 = vector.broadcast %cst_49 : f32 to vector<2x64xf32>
    %277 = arith.addf %276, %275 : vector<2x64xf32>
    %278 = arith.divf %276, %277 : vector<2x64xf32>
    %279 = vector.extract_strided_slice %272 {offsets = [0, 64], sizes = [2, 32], strides = [1, 1]} : vector<2x128xf32> to vector<2x32xf32>
    %280 = math.tanh %279 : vector<2x32xf32>
    %281 = vector.extract_strided_slice %272 {offsets = [0, 96], sizes = [2, 32], strides = [1, 1]} : vector<2x128xf32> to vector<2x32xf32>
    %282 = arith.negf %281 : vector<2x32xf32>
    %283 = math.exp %282 : vector<2x32xf32>
    %cst_50 = arith.constant 1.000000e+00 : f32
    %284 = vector.broadcast %cst_50 : f32 to vector<2x32xf32>
    %285 = arith.addf %284, %283 : vector<2x32xf32>
    %286 = arith.divf %284, %285 : vector<2x32xf32>
    %287 = vector.extract_strided_slice %278 {offsets = [0, 0], sizes = [2, 32], strides = [1, 1]} : vector<2x64xf32> to vector<2x32xf32>
    %288 = vector.extract_strided_slice %278 {offsets = [0, 32], sizes = [2, 32], strides = [1, 1]} : vector<2x64xf32> to vector<2x32xf32>
    %289 = arith.mulf %288, %266 : vector<2x32xf32>
    %290 = arith.mulf %287, %280 : vector<2x32xf32>
    %291 = arith.addf %289, %290 : vector<2x32xf32>
    %292 = math.tanh %291 : vector<2x32xf32>
    %293 = arith.mulf %286, %292 : vector<2x32xf32>
    %cst_51 = arith.constant dense<0.000000e+00> : vector<2x128xf32>
    %294 = tpu.matmul %121, %194, %cst_51 {dimension_numbers = #tpu.dot_dimension_numbers<[1], [0], [0], [1], [0, 0, 1, 1], [], []>} : vector<2x32xf32>, vector<32x128xf32>, vector<2x128xf32> -> vector<2x128xf32>
    %295 = arith.addf %294, %198 : vector<2x128xf32>
    %cst_52 = arith.constant dense<0.000000e+00> : vector<2x128xf32>
    %296 = tpu.matmul %293, %195, %cst_52 {dimension_numbers = #tpu.dot_dimension_numbers<[1], [0], [0], [1], [0, 0, 1, 1], [], []>} : vector<2x32xf32>, vector<32x128xf32>, vector<2x128xf32> -> vector<2x128xf32>
    %297 = arith.addf %295, %296 : vector<2x128xf32>
    %298 = vector.extract_strided_slice %297 {offsets = [0, 0], sizes = [2, 64], strides = [1, 1]} : vector<2x128xf32> to vector<2x64xf32>
    %299 = arith.negf %298 : vector<2x64xf32>
    %300 = math.exp %299 : vector<2x64xf32>
    %cst_53 = arith.constant 1.000000e+00 : f32
    %301 = vector.broadcast %cst_53 : f32 to vector<2x64xf32>
    %302 = arith.addf %301, %300 : vector<2x64xf32>
    %303 = arith.divf %301, %302 : vector<2x64xf32>
    %304 = vector.extract_strided_slice %297 {offsets = [0, 64], sizes = [2, 32], strides = [1, 1]} : vector<2x128xf32> to vector<2x32xf32>
    %305 = math.tanh %304 : vector<2x32xf32>
    %306 = vector.extract_strided_slice %297 {offsets = [0, 96], sizes = [2, 32], strides = [1, 1]} : vector<2x128xf32> to vector<2x32xf32>
    %307 = arith.negf %306 : vector<2x32xf32>
    %308 = math.exp %307 : vector<2x32xf32>
    %cst_54 = arith.constant 1.000000e+00 : f32
    %309 = vector.broadcast %cst_54 : f32 to vector<2x32xf32>
    %310 = arith.addf %309, %308 : vector<2x32xf32>
    %311 = arith.divf %309, %310 : vector<2x32xf32>
    %312 = vector.extract_strided_slice %303 {offsets = [0, 0], sizes = [2, 32], strides = [1, 1]} : vector<2x64xf32> to vector<2x32xf32>
    %313 = vector.extract_strided_slice %303 {offsets = [0, 32], sizes = [2, 32], strides = [1, 1]} : vector<2x64xf32> to vector<2x32xf32>
    %314 = arith.mulf %313, %291 : vector<2x32xf32>
    %315 = arith.mulf %312, %305 : vector<2x32xf32>
    %316 = arith.addf %314, %315 : vector<2x32xf32>
    %317 = math.tanh %316 : vector<2x32xf32>
    %318 = arith.mulf %311, %317 : vector<2x32xf32>
    %cst_55 = arith.constant dense<0.000000e+00> : vector<2x128xf32>
    %319 = tpu.matmul %145, %194, %cst_55 {dimension_numbers = #tpu.dot_dimension_numbers<[1], [0], [0], [1], [0, 0, 1, 1], [], []>} : vector<2x32xf32>, vector<32x128xf32>, vector<2x128xf32> -> vector<2x128xf32>
    %320 = arith.addf %319, %198 : vector<2x128xf32>
    %cst_56 = arith.constant dense<0.000000e+00> : vector<2x128xf32>
    %321 = tpu.matmul %318, %195, %cst_56 {dimension_numbers = #tpu.dot_dimension_numbers<[1], [0], [0], [1], [0, 0, 1, 1], [], []>} : vector<2x32xf32>, vector<32x128xf32>, vector<2x128xf32> -> vector<2x128xf32>
    %322 = arith.addf %320, %321 : vector<2x128xf32>
    %323 = vector.extract_strided_slice %322 {offsets = [0, 0], sizes = [2, 64], strides = [1, 1]} : vector<2x128xf32> to vector<2x64xf32>
    %324 = arith.negf %323 : vector<2x64xf32>
    %325 = math.exp %324 : vector<2x64xf32>
    %cst_57 = arith.constant 1.000000e+00 : f32
    %326 = vector.broadcast %cst_57 : f32 to vector<2x64xf32>
    %327 = arith.addf %326, %325 : vector<2x64xf32>
    %328 = arith.divf %326, %327 : vector<2x64xf32>
    %329 = vector.extract_strided_slice %322 {offsets = [0, 64], sizes = [2, 32], strides = [1, 1]} : vector<2x128xf32> to vector<2x32xf32>
    %330 = math.tanh %329 : vector<2x32xf32>
    %331 = vector.extract_strided_slice %322 {offsets = [0, 96], sizes = [2, 32], strides = [1, 1]} : vector<2x128xf32> to vector<2x32xf32>
    %332 = arith.negf %331 : vector<2x32xf32>
    %333 = math.exp %332 : vector<2x32xf32>
    %cst_58 = arith.constant 1.000000e+00 : f32
    %334 = vector.broadcast %cst_58 : f32 to vector<2x32xf32>
    %335 = arith.addf %334, %333 : vector<2x32xf32>
    %336 = arith.divf %334, %335 : vector<2x32xf32>
    %337 = vector.extract_strided_slice %328 {offsets = [0, 0], sizes = [2, 32], strides = [1, 1]} : vector<2x64xf32> to vector<2x32xf32>
    %338 = vector.extract_strided_slice %328 {offsets = [0, 32], sizes = [2, 32], strides = [1, 1]} : vector<2x64xf32> to vector<2x32xf32>
    %339 = arith.mulf %338, %316 : vector<2x32xf32>
    %340 = arith.mulf %337, %330 : vector<2x32xf32>
    %341 = arith.addf %339, %340 : vector<2x32xf32>
    %342 = math.tanh %341 : vector<2x32xf32>
    %343 = arith.mulf %336, %342 : vector<2x32xf32>
    %cst_59 = arith.constant dense<0.000000e+00> : vector<2x128xf32>
    %344 = tpu.matmul %169, %194, %cst_59 {dimension_numbers = #tpu.dot_dimension_numbers<[1], [0], [0], [1], [0, 0, 1, 1], [], []>} : vector<2x32xf32>, vector<32x128xf32>, vector<2x128xf32> -> vector<2x128xf32>
    %345 = arith.addf %344, %198 : vector<2x128xf32>
    %cst_60 = arith.constant dense<0.000000e+00> : vector<2x128xf32>
    %346 = tpu.matmul %343, %195, %cst_60 {dimension_numbers = #tpu.dot_dimension_numbers<[1], [0], [0], [1], [0, 0, 1, 1], [], []>} : vector<2x32xf32>, vector<32x128xf32>, vector<2x128xf32> -> vector<2x128xf32>
    %347 = arith.addf %345, %346 : vector<2x128xf32>
    %348 = vector.extract_strided_slice %347 {offsets = [0, 0], sizes = [2, 64], strides = [1, 1]} : vector<2x128xf32> to vector<2x64xf32>
    %349 = arith.negf %348 : vector<2x64xf32>
    %350 = math.exp %349 : vector<2x64xf32>
    %cst_61 = arith.constant 1.000000e+00 : f32
    %351 = vector.broadcast %cst_61 : f32 to vector<2x64xf32>
    %352 = arith.addf %351, %350 : vector<2x64xf32>
    %353 = arith.divf %351, %352 : vector<2x64xf32>
    %354 = vector.extract_strided_slice %347 {offsets = [0, 64], sizes = [2, 32], strides = [1, 1]} : vector<2x128xf32> to vector<2x32xf32>
    %355 = math.tanh %354 : vector<2x32xf32>
    %356 = vector.extract_strided_slice %347 {offsets = [0, 96], sizes = [2, 32], strides = [1, 1]} : vector<2x128xf32> to vector<2x32xf32>
    %357 = arith.negf %356 : vector<2x32xf32>
    %358 = math.exp %357 : vector<2x32xf32>
    %cst_62 = arith.constant 1.000000e+00 : f32
    %359 = vector.broadcast %cst_62 : f32 to vector<2x32xf32>
    %360 = arith.addf %359, %358 : vector<2x32xf32>
    %361 = arith.divf %359, %360 : vector<2x32xf32>
    %362 = vector.extract_strided_slice %353 {offsets = [0, 0], sizes = [2, 32], strides = [1, 1]} : vector<2x64xf32> to vector<2x32xf32>
    %363 = vector.extract_strided_slice %353 {offsets = [0, 32], sizes = [2, 32], strides = [1, 1]} : vector<2x64xf32> to vector<2x32xf32>
    %364 = arith.mulf %363, %341 : vector<2x32xf32>
    %365 = arith.mulf %362, %355 : vector<2x32xf32>
    %366 = arith.addf %364, %365 : vector<2x32xf32>
    %367 = math.tanh %366 : vector<2x32xf32>
    %368 = arith.mulf %361, %367 : vector<2x32xf32>
    %cst_63 = arith.constant dense<0.000000e+00> : vector<2x128xf32>
    %369 = tpu.matmul %193, %194, %cst_63 {dimension_numbers = #tpu.dot_dimension_numbers<[1], [0], [0], [1], [0, 0, 1, 1], [], []>} : vector<2x32xf32>, vector<32x128xf32>, vector<2x128xf32> -> vector<2x128xf32>
    %370 = arith.addf %369, %198 : vector<2x128xf32>
    %cst_64 = arith.constant dense<0.000000e+00> : vector<2x128xf32>
    %371 = tpu.matmul %368, %195, %cst_64 {dimension_numbers = #tpu.dot_dimension_numbers<[1], [0], [0], [1], [0, 0, 1, 1], [], []>} : vector<2x32xf32>, vector<32x128xf32>, vector<2x128xf32> -> vector<2x128xf32>
    %372 = arith.addf %370, %371 : vector<2x128xf32>
    %373 = vector.extract_strided_slice %372 {offsets = [0, 0], sizes = [2, 64], strides = [1, 1]} : vector<2x128xf32> to vector<2x64xf32>
    %374 = arith.negf %373 : vector<2x64xf32>
    %375 = math.exp %374 : vector<2x64xf32>
    %cst_65 = arith.constant 1.000000e+00 : f32
    %376 = vector.broadcast %cst_65 : f32 to vector<2x64xf32>
    %377 = arith.addf %376, %375 : vector<2x64xf32>
    %378 = arith.divf %376, %377 : vector<2x64xf32>
    %379 = vector.extract_strided_slice %372 {offsets = [0, 64], sizes = [2, 32], strides = [1, 1]} : vector<2x128xf32> to vector<2x32xf32>
    %380 = math.tanh %379 : vector<2x32xf32>
    %381 = vector.extract_strided_slice %372 {offsets = [0, 96], sizes = [2, 32], strides = [1, 1]} : vector<2x128xf32> to vector<2x32xf32>
    %382 = arith.negf %381 : vector<2x32xf32>
    %383 = math.exp %382 : vector<2x32xf32>
    %cst_66 = arith.constant 1.000000e+00 : f32
    %384 = vector.broadcast %cst_66 : f32 to vector<2x32xf32>
    %385 = arith.addf %384, %383 : vector<2x32xf32>
    %386 = arith.divf %384, %385 : vector<2x32xf32>
    %387 = vector.extract_strided_slice %378 {offsets = [0, 0], sizes = [2, 32], strides = [1, 1]} : vector<2x64xf32> to vector<2x32xf32>
    %388 = vector.extract_strided_slice %378 {offsets = [0, 32], sizes = [2, 32], strides = [1, 1]} : vector<2x64xf32> to vector<2x32xf32>
    %389 = arith.mulf %388, %366 : vector<2x32xf32>
    %390 = arith.mulf %387, %380 : vector<2x32xf32>
    %391 = arith.addf %389, %390 : vector<2x32xf32>
    %392 = math.tanh %391 : vector<2x32xf32>
    %393 = arith.mulf %386, %392 : vector<2x32xf32>
    %c0_67 = arith.constant 0 : index
    %c0_68 = arith.constant 0 : index
    %394 = vector.load %arg7[%c0_67, %c0_68] : memref<32x16xf32, #tpu.memory_space<vmem>>, vector<32x16xf32>
    %cst_69 = arith.constant dense<0.000000e+00> : vector<2x16xf32>
    %395 = tpu.matmul %393, %394, %cst_69 {dimension_numbers = #tpu.dot_dimension_numbers<[1], [0], [0], [1], [0, 0, 1, 1], [], []>} : vector<2x32xf32>, vector<32x16xf32>, vector<2x16xf32> -> vector<2x16xf32>
    %c0_70 = arith.constant 0 : index
    %c0_71 = arith.constant 0 : index
    %396 = vector.load %arg8[%c0_70, %c0_71] : memref<1x16xf32, #tpu.memory_space<vmem>>, vector<1x16xf32>
    %397 = vector.broadcast %396 : vector<1x16xf32> to vector<2x16xf32>
    %398 = arith.addf %395, %397 : vector<2x16xf32>
    %c0_72 = arith.constant 0 : index
    %c0_73 = arith.constant 0 : index
    %399 = vector.load %arg9[%c0_72, %c0_73] : memref<2x16xf32, #tpu.memory_space<vmem>>, vector<2x16xf32>
    tpu.vector_store %arg9[%c0_72, %c0_73], %398 {strides = array<i32>} : memref<2x16xf32, #tpu.memory_space<vmem>>, vector<2x16xf32>,
    return
  }
}

</mosaic_0001>

<llo_original>
// kernel: lstm_forward.1
$region0: #{lstm_forward.1}
  #allocation0 [shape = 'u32[]', space=smem, size = 0x4, offset = 0x4, fixed_abs, tag = 'smem constant byte address 0x4 - core index']
  #allocation1 [shape = 'u32[144,128]{1,0:T(1,128)}', space=vmem, size = 0x12000, scoped, tag = 'internal scratch']
  %s0 = inlined_call_operand.vmem [shape: f32[16,4], index: 0, kind: input, shape index: {}]
  %s1 = inlined_call_operand.hbm [shape: f32[4,128], index: 1, kind: input, shape index: {}]
  %s2 = inlined_call_operand.vmem [shape: f32[32,128], index: 2, kind: input, shape index: {}]
  %s3 = inlined_call_operand.vmem [shape: f32[1,128], index: 3, kind: input, shape index: {}]
  %s4 = inlined_call_operand.vmem [shape: f32[32,128], index: 4, kind: input, shape index: {}]
  %s5 = inlined_call_operand.vmem [shape: f32[32,128], index: 5, kind: input, shape index: {}]
  %s6 = inlined_call_operand.vmem [shape: f32[1,128], index: 6, kind: input, shape index: {}]
  %s7 = inlined_call_operand.vmem [shape: f32[32,16], index: 7, kind: input, shape index: {}]
  %s8 = inlined_call_operand.hbm [shape: f32[1,16], index: 8, kind: input, shape index: {}]
  %s9 = inlined_call_operand.vmem [shape: f32[2,16], index: 9, kind: output, shape index: {}]
  %s10 = sld [smem:[#allocation0]]
  $region54: #{lstm_forward.1} parent=0
    _
  %s12 = ssub.s32 1, %s10
  %s13 = scalar_select 0, %s12, %s10
  $region1: #{lstm_forward.1} parent=0
    #allocation2 [shape = 'u8[2048]{0}', space=vmem, size = 0x800, scoped, tag = 'input window, operand 1, single buffered']
    #allocation3 [shape = 's32[1]{0}', space=sflag, size = 0x4, scoped, tag = 'scoped memory for lstm_forward.1']
    #allocation4 [shape = 'u8[512]{0}', space=vmem, size = 0x400, scoped, tag = 'input window, operand 8, single buffered']
    #allocation5 [shape = 's32[1]{0}', space=sflag, size = 0x4, scoped, tag = 'scoped memory for lstm_forward.1']
    %14 = vsyncpa [#allocation3], 0
    %15 = vsyncpa [#allocation5], 0
    // Predicated region
    $region2: #{lstm_forward.1} parent=1 // pred_check
      _
    $region3: #{lstm_forward.1} parent=1 // pred_check_branch
      %17 = sbr.rel (0) target = $region5
    $region4: #{lstm_forward.1} parent=1 // pred_region
      _
    $region5: #{lstm_forward.1} parent=1 // pred_fallthru
      _
    // Predicated region
    $region6: #{lstm_forward.1} parent=1 // pred_check
      _
    $region7: #{lstm_forward.1} parent=1 // pred_check_branch
      %19 = sbr.rel (0) target = $region9
    $region8: #{lstm_forward.1} parent=1 // pred_region
      %s21 = ssub.s32 64, 64
      %22 = vsyncadd [#allocation3], %s21
      %s24 = sshll.u32 [#allocation2], 4
      %s25 = int_to_ptr.vmem [resolvable:$true] %s24
      %27 = dma.hbm_to_vmem [thread:$0]  %s1, 64, %s25, [#allocation3]
    $region9: #{lstm_forward.1} parent=1 // pred_fallthru
      _
    // Predicated region
    $region10: #{lstm_forward.1} parent=1 // pred_check
      _
    $region11: #{lstm_forward.1} parent=1 // pred_check_branch
      %29 = sbr.rel (0) target = $region13
    $region12: #{lstm_forward.1} parent=1 // pred_region
      _
    $region13: #{lstm_forward.1} parent=1 // pred_fallthru
      _
    // Predicated region
    $region14: #{lstm_forward.1} parent=1 // pred_check
      _
    $region15: #{lstm_forward.1} parent=1 // pred_check_branch
      %31 = sbr.rel (0) target = $region17
    $region16: #{lstm_forward.1} parent=1 // pred_region
      _
    $region17: #{lstm_forward.1} parent=1 // pred_fallthru
      _
    // Predicated region
    $region18: #{lstm_forward.1} parent=1 // pred_check
      _
    $region19: #{lstm_forward.1} parent=1 // pred_check_branch
      %33 = sbr.rel (0) target = $region21
    $region20: #{lstm_forward.1} parent=1 // pred_region
      _
    $region21: #{lstm_forward.1} parent=1 // pred_fallthru
      _
    // Predicated region
    $region22: #{lstm_forward.1} parent=1 // pred_check
      _
    $region23: #{lstm_forward.1} parent=1 // pred_check_branch
      %35 = sbr.rel (0) target = $region25
    $region24: #{lstm_forward.1} parent=1 // pred_region
      _
    $region25: #{lstm_forward.1} parent=1 // pred_fallthru
      _
    // Predicated region
    $region26: #{lstm_forward.1} parent=1 // pred_check
      _
    $region27: #{lstm_forward.1} parent=1 // pred_check_branch
      %37 = sbr.rel (0) target = $region29
    $region28: #{lstm_forward.1} parent=1 // pred_region
      _
    $region29: #{lstm_forward.1} parent=1 // pred_fallthru
      _
    // Predicated region
    $region30: #{lstm_forward.1} parent=1 // pred_check
      _
    $region31: #{lstm_forward.1} parent=1 // pred_check_branch
      %39 = sbr.rel (0) target = $region33
    $region32: #{lstm_forward.1} parent=1 // pred_region
      _
    $region33: #{lstm_forward.1} parent=1 // pred_fallthru
      _
    // Predicated region
    $region34: #{lstm_forward.1} parent=1 // pred_check
      _
    $region35: #{lstm_forward.1} parent=1 // pred_check_branch
      %41 = sbr.rel (0) target = $region37
    $region36: #{lstm_forward.1} parent=1 // pred_region
      %s43 = ssub.s32 16, 16
      %44 = vsyncadd [#allocation5], %s43
      %s46 = sshll.u32 [#allocation4], 4
      %s47 = int_to_ptr.vmem [resolvable:$true] %s46
      %49 = dma.hbm_to_vmem [thread:$0]  %s8, 16, %s47, [#allocation5]
    $region37: #{lstm_forward.1} parent=1 // pred_fallthru
      _
    // Predicated region
    $region38: #{lstm_forward.1} parent=1 // pred_check
      _
    $region39: #{lstm_forward.1} parent=1 // pred_check_branch
      %51 = sbr.rel (0) target = $region41
    $region40: #{lstm_forward.1} parent=1 // pred_region
      %52 = dma.done [#allocation3], 64
    $region41: #{lstm_forward.1} parent=1 // pred_fallthru
      _
    // Predicated region
    $region42: #{lstm_forward.1} parent=1 // pred_check
      _
    $region43: #{lstm_forward.1} parent=1 // pred_check_branch
      %54 = sbr.rel (0) target = $region45
    $region44: #{lstm_forward.1} parent=1 // pred_region
      %55 = dma.done [#allocation5], 16
    $region45: #{lstm_forward.1} parent=1 // pred_fallthru
      _
    %v56 = vld [vmem:[#allocation2] sm:$0xf]
    %v57 = vld [vmem:[%s2] sm:$0xff]
    %v58 = vld [vmem:[%s2 + $0x8] sm:$0xff]
    %v59 = vld [vmem:[%s2 + $0x10] sm:$0xff]
    %v60 = vld [vmem:[%s2 + $0x18] sm:$0xff]
    %v61 = vld [vmem:[%s3] sm:$0x1]
    %v62 = vld [vmem:[%s0] sm:$0xff]
    %v63 = vld [vmem:[%s0 + $0x8] sm:$0xff]
    %v65 = vlaneseq
    %v66 = vshrl.u32 %v65, 7
    %v67 = vsub.s32 0, %v66
    %v68 = vrot.slane %v61, %v67
    %vm70 = vcmask 31744
    %v72 = vsel %vm70, %v62, 0
    %v75 = vsel %vm70, %v63, 0
    %vm77 = vcmask 1043456
    %v79 = vsel %vm77, %v56, 0
    %81 = vmatprep.subr.mxu0 0.0
    %82 = vmatpush1.msra.mxu0 %v79
    %83 = vmatprep.subr.mxu0 0.0
    %84 = vmatpush1.msra.mxu0 0.0
    %85 = vmatprep.subr.mxu0 0.0
    %86 = vmatpush1.msra.mxu0 0.0
    %87 = vmatprep.subr.mxu0 0.0
    %88 = vmatpush1.msra.mxu0 0.0
    %89 = vmatprep.subr.mxu0 0.0
    %90 = vmatpush1.msra.mxu0 0.0
    %91 = vmatprep.subr.mxu0 0.0
    %92 = vmatpush1.msra.mxu0 0.0
    %93 = vmatprep.subr.mxu0 0.0
    %94 = vmatpush1.msra.mxu0 0.0
    %95 = vmatprep.subr.mxu0 0.0
    %96 = vmatpush1.msra.mxu0 0.0
    %97 = vmatprep.subr.mxu0 0.0
    %98 = vmatpush1.msra.mxu0 0.0
    %99 = vmatprep.subr.mxu0 0.0
    %100 = vmatpush1.msra.mxu0 0.0
    %101 = vmatprep.subr.mxu0 0.0
    %102 = vmatpush1.msra.mxu0 0.0
    %103 = vmatprep.subr.mxu0 0.0
    %104 = vmatpush1.msra.mxu0 0.0
    %105 = vmatprep.subr.mxu0 0.0
    %106 = vmatpush1.msra.mxu0 0.0
    %107 = vmatprep.subr.mxu0 0.0
    %108 = vmatpush1.msra.mxu0 0.0
    %109 = vmatprep.subr.mxu0 0.0
    %110 = vmatpush1.msra.mxu0 0.0
    %111 = vmatprep.subr.mxu0 0.0
    %112 = vmatpush1.msra.mxu0 0.0
    %113 = vmatprep.subr.mxu0 0.0
    %114 = vmatpush1.msra.mxu0 0.0
    %115 = vmatprep.subr.mxu0 0.0
    %116 = vmatpush1.msra.mxu0 0.0
    %117 = vmatprep.subr.mxu0 0.0
    %118 = vmatpush1.msra.mxu0 0.0
    %119 = vmatprep.subr.mxu0 0.0
    %120 = vmatpush1.msra.mxu0 0.0
    %121 = vmatprep.subr.mxu0 0.0
    %122 = vmatpush1.msra.mxu0 0.0
    %123 = vmatprep.subr.mxu0 0.0
    %124 = vmatpush1.msra.mxu0 0.0
    %125 = vmatprep.subr.mxu0 0.0
    %126 = vmatpush1.msra.mxu0 0.0
    %127 = vmatprep.subr.mxu0 0.0
    %128 = vmatpush1.msra.mxu0 0.0
    %129 = vmatprep.subr.mxu0 0.0
    %130 = vmatpush1.msra.mxu0 0.0
    %131 = vmatprep.subr.mxu0 0.0
    %132 = vmatpush1.msra.mxu0 0.0
    %133 = vmatprep.subr.mxu0 0.0
    %134 = vmatpush1.msra.mxu0 0.0
    %135 = vmatprep.subr.mxu0 0.0
    %136 = vmatpush1.msra.mxu0 0.0
    %137 = vmatprep.subr.mxu0 0.0
    %138 = vmatpush1.msra.mxu0 0.0
    %139 = vmatprep.subr.mxu0 0.0
    %140 = vmatpush1.msra.mxu0 0.0
    %141 = vmatprep.subr.mxu0 0.0
    %142 = vmatpush1.msra.mxu0 0.0
    %143 = vmatprep.subr.mxu0 0.0
    %144 = vmatpush1.msra.mxu0 0.0
    %145 = vmatprep.mubr.f32.mxu0 0.0
    %146 = vmatmul.mubr.f32.gmra.mrb[0].mxu0 %v72
    %v147 = vpop.f32.mrb[0].mxu0
    %v148 = vadd.f32 %v68, %v147
    %v149 = vpop.f32.mrb[0].mxu0
    %150 = vmatprep.mubr.f32.mxu0 0.0
    %151 = vmatmul.mubr.f32.gmra.mrb[0].mxu0 %v75
    %v152 = vpop.f32.mrb[0].mxu0
    %v153 = vadd.f32 %v68, %v152
    %v154 = vpop.f32.mrb[0].mxu0
    %155 = vdwg.mxu0
    %v156 = vxor.u32 %v148, 2147483648
    %v157 = vmul.f32 %v156, 1.442695
    %v158 = vpow.pop %v157
    %v159 = vadd.f32 %v158, 1.0
    %v160 = vrcp.pop %v159
    %v161 = vmul.f32 1.0, %v160
    %v162 = vtanh.pop %v148
    %164 = vrot.lane.b32.xlu0 %v162, 64
    %v165 = vpop.permute.xlu0 %164
    %v167 = vmul.f32 %v161, %v165
    %v168 = vtanh.pop %v167
    %170 = vrot.lane.b32.xlu0 %v168, 96
    %v171 = vpop.permute.xlu0 %170
    %v173 = vmul.f32 %v161, %v171
    %175 = vrot.lane.b32.xlu0 %v173, 32
    %v176 = vpop.permute.xlu0 %175
    %vm177 = vcmask 261120
    %v178 = vsel %vm177, %v176, 0
    %180 = vmatprep.subr.mxu0 0.0
    %181 = vmatpush1.msra.mxu0 %v57
    %182 = vmatprep.subr.mxu0 0.0
    %183 = vmatpush1.msra.mxu0 %v58
    %184 = vmatprep.subr.mxu0 0.0
    %185 = vmatpush1.msra.mxu0 %v59
    %186 = vmatprep.subr.mxu0 0.0
    %187 = vmatpush1.msra.mxu0 %v60
    %188 = vmatprep.subr.mxu0 0.0
    %189 = vmatpush1.msra.mxu0 0.0
    %190 = vmatprep.subr.mxu0 0.0
    %191 = vmatpush1.msra.mxu0 0.0
    %192 = vmatprep.subr.mxu0 0.0
    %193 = vmatpush1.msra.mxu0 0.0
    %194 = vmatprep.subr.mxu0 0.0
    %195 = vmatpush1.msra.mxu0 0.0
    %196 = vmatprep.subr.mxu0 0.0
    %197 = vmatpush1.msra.mxu0 0.0
    %198 = vmatprep.subr.mxu0 0.0
    %199 = vmatpush1.msra.mxu0 0.0
    %200 = vmatprep.subr.mxu0 0.0
    %201 = vmatpush1.msra.mxu0 0.0
    %202 = vmatprep.subr.mxu0 0.0
    %203 = vmatpush1.msra.mxu0 0.0
    %204 = vmatprep.subr.mxu0 0.0
    %205 = vmatpush1.msra.mxu0 0.0
    %206 = vmatprep.subr.mxu0 0.0
    %207 = vmatpush1.msra.mxu0 0.0
    %208 = vmatprep.subr.mxu0 0.0
    %209 = vmatpush1.msra.mxu0 0.0
    %210 = vmatprep.subr.mxu0 0.0
    %211 = vmatpush1.msra.mxu0 0.0
    %212 = vmatprep.subr.mxu0 0.0
    %213 = vmatpush1.msra.mxu0 0.0
    %214 = vmatprep.subr.mxu0 0.0
    %215 = vmatpush1.msra.mxu0 0.0
    %216 = vmatprep.subr.mxu0 0.0
    %217 = vmatpush1.msra.mxu0 0.0
    %218 = vmatprep.subr.mxu0 0.0
    %219 = vmatpush1.msra.mxu0 0.0
    %220 = vmatprep.subr.mxu0 0.0
    %221 = vmatpush1.msra.mxu0 0.0
    %222 = vmatprep.subr.mxu0 0.0
    %223 = vmatpush1.msra.mxu0 0.0
    %224 = vmatprep.subr.mxu0 0.0
    %225 = vmatpush1.msra.mxu0 0.0
    %226 = vmatprep.subr.mxu0 0.0
    %227 = vmatpush1.msra.mxu0 0.0
    %228 = vmatprep.subr.mxu0 0.0
    %229 = vmatpush1.msra.mxu0 0.0
    %230 = vmatprep.subr.mxu0 0.0
    %231 = vmatpush1.msra.mxu0 0.0
    %232 = vmatprep.subr.mxu0 0.0
    %233 = vmatpush1.msra.mxu0 0.0
    %234 = vmatprep.subr.mxu0 0.0
    %235 = vmatpush1.msra.mxu0 0.0
    %236 = vmatprep.subr.mxu0 0.0
    %237 = vmatpush1.msra.mxu0 0.0
    %238 = vmatprep.subr.mxu0 0.0
    %239 = vmatpush1.msra.mxu0 0.0
    %240 = vmatprep.subr.mxu0 0.0
    %241 = vmatpush1.msra.mxu0 0.0
    %242 = vmatprep.subr.mxu0 0.0
    %243 = vmatpush1.msra.mxu0 0.0
    %244 = vmatprep.mubr.f32.mxu0 0.0
    %245 = vmatmul.mubr.f32.gmra.mrb[0].mxu0 %v178
    %v246 = vpop.f32.mrb[0].mxu0
    %v247 = vadd.f32 0.0, %v246
    %v248 = vpop.f32.mrb[0].mxu0
    %249 = vdwg.mxu0
    %v251 = vrot.slane %v247, 6
    %v253 = vadd.f32 %v148, %v251
    %v254 = vxor.u32 %v253, 2147483648
    %v255 = vmul.f32 %v254, 1.442695
    %v256 = vpow.pop %v255
    %v257 = vadd.f32 %v256, 1.0
    %v258 = vrcp.pop %v257
    %v259 = vmul.f32 1.0, %v258
    %v260 = vtanh.pop %v253
    %v262 = vrot.slane %v167, 6
    %263 = vrot.lane.b32.xlu0 %v262, 32
    %v264 = vpop.permute.xlu0 %263
    %v266 = vmul.f32 %v259, %v264
    %268 = vrot.lane.b32.xlu0 %v260, 64
    %v269 = vpop.permute.xlu0 %268
    %v271 = vmul.f32 %v259, %v269
    %273 = vrot.lane.b32.xlu0 %v271, 32
    %v274 = vpop.permute.xlu0 %273
    %v276 = vadd.f32 %v266, %v274
    %v277 = vtanh.pop %v276
    %279 = vrot.lane.b32.xlu0 %v277, 64
    %v280 = vpop.permute.xlu0 %279
    %v282 = vmul.f32 %v259, %v280
    %v284 = vrot.slane %v282, 2
    %285 = vrot.lane.b32.xlu0 %v284, 32
    %v286 = vpop.permute.xlu0 %285
    %v287 = vsel %vm177, %v286, 0
    %289 = vmatprep.subr.mxu0 0.0
    %290 = vmatpush1.msra.mxu0 %v57
    %291 = vmatprep.subr.mxu0 0.0
    %292 = vmatpush1.msra.mxu0 %v58
    %293 = vmatprep.subr.mxu0 0.0
    %294 = vmatpush1.msra.mxu0 %v59
    %295 = vmatprep.subr.mxu0 0.0
    %296 = vmatpush1.msra.mxu0 %v60
    %297 = vmatprep.subr.mxu0 0.0
    %298 = vmatpush1.msra.mxu0 0.0
    %299 = vmatprep.subr.mxu0 0.0
    %300 = vmatpush1.msra.mxu0 0.0
    %301 = vmatprep.subr.mxu0 0.0
    %302 = vmatpush1.msra.mxu0 0.0
    %303 = vmatprep.subr.mxu0 0.0
    %304 = vmatpush1.msra.mxu0 0.0
    %305 = vmatprep.subr.mxu0 0.0
    %306 = vmatpush1.msra.mxu0 0.0
    %307 = vmatprep.subr.mxu0 0.0
    %308 = vmatpush1.msra.mxu0 0.0
    %309 = vmatprep.subr.mxu0 0.0
    %310 = vmatpush1.msra.mxu0 0.0
    %311 = vmatprep.subr.mxu0 0.0
    %312 = vmatpush1.msra.mxu0 0.0
    %313 = vmatprep.subr.mxu0 0.0
    %314 = vmatpush1.msra.mxu0 0.0
    %315 = vmatprep.subr.mxu0 0.0
    %316 = vmatpush1.msra.mxu0 0.0
    %317 = vmatprep.subr.mxu0 0.0
    %318 = vmatpush1.msra.mxu0 0.0
    %319 = vmatprep.subr.mxu0 0.0
    %320 = vmatpush1.msra.mxu0 0.0
    %321 = vmatprep.subr.mxu0 0.0
    %322 = vmatpush1.msra.mxu0 0.0
    %323 = vmatprep.subr.mxu0 0.0
    %324 = vmatpush1.msra.mxu0 0.0
    %325 = vmatprep.subr.mxu0 0.0
    %326 = vmatpush1.msra.mxu0 0.0
    %327 = vmatprep.subr.mxu0 0.0
    %328 = vmatpush1.msra.mxu0 0.0
    %329 = vmatprep.subr.mxu0 0.0
    %330 = vmatpush1.msra.mxu0 0.0
    %331 = vmatprep.subr.mxu0 0.0
    %332 = vmatpush1.msra.mxu0 0.0
    %333 = vmatprep.subr.mxu0 0.0
    %334 = vmatpush1.msra.mxu0 0.0
    %335 = vmatprep.subr.mxu0 0.0
    %336 = vmatpush1.msra.mxu0 0.0
    %337 = vmatprep.subr.mxu0 0.0
    %338 = vmatpush1.msra.mxu0 0.0
    %339 = vmatprep.subr.mxu0 0.0
    %340 = vmatpush1.msra.mxu0 0.0
    %341 = vmatprep.subr.mxu0 0.0
    %342 = vmatpush1.msra.mxu0 0.0
    %343 = vmatprep.subr.mxu0 0.0
    %344 = vmatpush1.msra.mxu0 0.0
    %345 = vmatprep.subr.mxu0 0.0
    %346 = vmatpush1.msra.mxu0 0.0
    %347 = vmatprep.subr.mxu0 0.0
    %348 = vmatpush1.msra.mxu0 0.0
    %349 = vmatprep.subr.mxu0 0.0
    %350 = vmatpush1.msra.mxu0 0.0
    %351 = vmatprep.subr.mxu0 0.0
    %352 = vmatpush1.msra.mxu0 0.0
    %353 = vmatprep.mubr.f32.mxu0 0.0
    %354 = vmatmul.mubr.f32.gmra.mrb[0].mxu0 %v287
    %v355 = vpop.f32.mrb[0].mxu0
    %v356 = vadd.f32 0.0, %v355
    %v357 = vpop.f32.mrb[0].mxu0
    %358 = vdwg.mxu0
    %v360 = vrot.slane %v356, 4
    %v362 = vadd.f32 %v148, %v360
    %v363 = vxor.u32 %v362, 2147483648
    %v364 = vmul.f32 %v363, 1.442695
    %v365 = vpow.pop %v364
    %v366 = vadd.f32 %v365, 1.0
    %v367 = vrcp.pop %v366
    %v368 = vmul.f32 1.0, %v367
    %v369 = vtanh.pop %v362
    %v371 = vrot.slane %v276, 6
    %v373 = vmul.f32 %v368, %v371
    %375 = vrot.lane.b32.xlu0 %v369, 64
    %v376 = vpop.permute.xlu0 %375
    %v378 = vmul.f32 %v368, %v376
    %380 = vrot.lane.b32.xlu0 %v378, 32
    %v381 = vpop.permute.xlu0 %380
    %v383 = vadd.f32 %v373, %v381
    %v384 = vtanh.pop %v383
    %386 = vrot.lane.b32.xlu0 %v384, 64
    %v387 = vpop.permute.xlu0 %386
    %v389 = vmul.f32 %v368, %v387
    %v391 = vrot.slane %v389, 4
    %392 = vrot.lane.b32.xlu0 %v391, 32
    %v393 = vpop.permute.xlu0 %392
    %v394 = vsel %vm177, %v393, 0
    %396 = vmatprep.subr.mxu0 0.0
    %397 = vmatpush1.msra.mxu0 %v57
    %398 = vmatprep.subr.mxu0 0.0
    %399 = vmatpush1.msra.mxu0 %v58
    %400 = vmatprep.subr.mxu0 0.0
    %401 = vmatpush1.msra.mxu0 %v59
    %402 = vmatprep.subr.mxu0 0.0
    %403 = vmatpush1.msra.mxu0 %v60
    %404 = vmatprep.subr.mxu0 0.0
    %405 = vmatpush1.msra.mxu0 0.0
    %406 = vmatprep.subr.mxu0 0.0
    %407 = vmatpush1.msra.mxu0 0.0
    %408 = vmatprep.subr.mxu0 0.0
    %409 = vmatpush1.msra.mxu0 0.0
    %410 = vmatprep.subr.mxu0 0.0
    %411 = vmatpush1.msra.mxu0 0.0
    %412 = vmatprep.subr.mxu0 0.0
    %413 = vmatpush1.msra.mxu0 0.0
    %414 = vmatprep.subr.mxu0 0.0
    %415 = vmatpush1.msra.mxu0 0.0
    %416 = vmatprep.subr.mxu0 0.0
    %417 = vmatpush1.msra.mxu0 0.0
    %418 = vmatprep.subr.mxu0 0.0
    %419 = vmatpush1.msra.mxu0 0.0
    %420 = vmatprep.subr.mxu0 0.0
    %421 = vmatpush1.msra.mxu0 0.0
    %422 = vmatprep.subr.mxu0 0.0
    %423 = vmatpush1.msra.mxu0 0.0
    %424 = vmatprep.subr.mxu0 0.0
    %425 = vmatpush1.msra.mxu0 0.0
    %426 = vmatprep.subr.mxu0 0.0
    %427 = vmatpush1.msra.mxu0 0.0
    %428 = vmatprep.subr.mxu0 0.0
    %429 = vmatpush1.msra.mxu0 0.0
    %430 = vmatprep.subr.mxu0 0.0
    %431 = vmatpush1.msra.mxu0 0.0
    %432 = vmatprep.subr.mxu0 0.0
    %433 = vmatpush1.msra.mxu0 0.0
    %434 = vmatprep.subr.mxu0 0.0
    %435 = vmatpush1.msra.mxu0 0.0
    %436 = vmatprep.subr.mxu0 0.0
    %437 = vmatpush1.msra.mxu0 0.0
    %438 = vmatprep.subr.mxu0 0.0
    %439 = vmatpush1.msra.mxu0 0.0
    %440 = vmatprep.subr.mxu0 0.0
    %441 = vmatpush1.msra.mxu0 0.0
    %442 = vmatprep.subr.mxu0 0.0
    %443 = vmatpush1.msra.mxu0 0.0
    %444 = vmatprep.subr.mxu0 0.0
    %445 = vmatpush1.msra.mxu0 0.0
    %446 = vmatprep.subr.mxu0 0.0
    %447 = vmatpush1.msra.mxu0 0.0
    %448 = vmatprep.subr.mxu0 0.0
    %449 = vmatpush1.msra.mxu0 0.0
    %450 = vmatprep.subr.mxu0 0.0
    %451 = vmatpush1.msra.mxu0 0.0
    %452 = vmatprep.subr.mxu0 0.0
    %453 = vmatpush1.msra.mxu0 0.0
    %454 = vmatprep.subr.mxu0 0.0
    %455 = vmatpush1.msra.mxu0 0.0
    %456 = vmatprep.subr.mxu0 0.0
    %457 = vmatpush1.msra.mxu0 0.0
    %458 = vmatprep.subr.mxu0 0.0
    %459 = vmatpush1.msra.mxu0 0.0
    %460 = vmatprep.mubr.f32.mxu0 0.0
    %461 = vmatmul.mubr.f32.gmra.mrb[0].mxu0 %v394
    %v462 = vpop.f32.mrb[0].mxu0
    %v463 = vadd.f32 0.0, %v462
    %v464 = vpop.f32.mrb[0].mxu0
    %465 = vdwg.mxu0
    %v467 = vrot.slane %v463, 2
    %v469 = vadd.f32 %v148, %v467
    %v470 = vxor.u32 %v469, 2147483648
    %v471 = vmul.f32 %v470, 1.442695
    %v472 = vpow.pop %v471
    %v473 = vadd.f32 %v472, 1.0
    %v474 = vrcp.pop %v473
    %v475 = vmul.f32 1.0, %v474
    %v476 = vtanh.pop %v469
    %v478 = vrot.slane %v383, 6
    %v480 = vmul.f32 %v475, %v478
    %482 = vrot.lane.b32.xlu0 %v476, 64
    %v483 = vpop.permute.xlu0 %482
    %v485 = vmul.f32 %v475, %v483
    %487 = vrot.lane.b32.xlu0 %v485, 32
    %v488 = vpop.permute.xlu0 %487
    %v490 = vadd.f32 %v480, %v488
    %v491 = vtanh.pop %v490
    %493 = vrot.lane.b32.xlu0 %v491, 64
    %v494 = vpop.permute.xlu0 %493
    %v496 = vmul.f32 %v475, %v494
    %v498 = vrot.slane %v496, 6
    %499 = vrot.lane.b32.xlu0 %v498, 32
    %v500 = vpop.permute.xlu0 %499
    %v501 = vsel %vm177, %v500, 0
    %503 = vmatprep.subr.mxu0 0.0
    %504 = vmatpush1.msra.mxu0 %v57
    %505 = vmatprep.subr.mxu0 0.0
    %506 = vmatpush1.msra.mxu0 %v58
    %507 = vmatprep.subr.mxu0 0.0
    %508 = vmatpush1.msra.mxu0 %v59
    %509 = vmatprep.subr.mxu0 0.0
    %510 = vmatpush1.msra.mxu0 %v60
    %511 = vmatprep.subr.mxu0 0.0
    %512 = vmatpush1.msra.mxu0 0.0
    %513 = vmatprep.subr.mxu0 0.0
    %514 = vmatpush1.msra.mxu0 0.0
    %515 = vmatprep.subr.mxu0 0.0
    %516 = vmatpush1.msra.mxu0 0.0
    %517 = vmatprep.subr.mxu0 0.0
    %518 = vmatpush1.msra.mxu0 0.0
    %519 = vmatprep.subr.mxu0 0.0
    %520 = vmatpush1.msra.mxu0 0.0
    %521 = vmatprep.subr.mxu0 0.0
    %522 = vmatpush1.msra.mxu0 0.0
    %523 = vmatprep.subr.mxu0 0.0
    %524 = vmatpush1.msra.mxu0 0.0
    %525 = vmatprep.subr.mxu0 0.0
    %526 = vmatpush1.msra.mxu0 0.0
    %527 = vmatprep.subr.mxu0 0.0
    %528 = vmatpush1.msra.mxu0 0.0
    %529 = vmatprep.subr.mxu0 0.0
    %530 = vmatpush1.msra.mxu0 0.0
    %531 = vmatprep.subr.mxu0 0.0
    %532 = vmatpush1.msra.mxu0 0.0
    %533 = vmatprep.subr.mxu0 0.0
    %534 = vmatpush1.msra.mxu0 0.0
    %535 = vmatprep.subr.mxu0 0.0
    %536 = vmatpush1.msra.mxu0 0.0
    %537 = vmatprep.subr.mxu0 0.0
    %538 = vmatpush1.msra.mxu0 0.0
    %539 = vmatprep.subr.mxu0 0.0
    %540 = vmatpush1.msra.mxu0 0.0
    %541 = vmatprep.subr.mxu0 0.0
    %542 = vmatpush1.msra.mxu0 0.0
    %543 = vmatprep.subr.mxu0 0.0
    %544 = vmatpush1.msra.mxu0 0.0
    %545 = vmatprep.subr.mxu0 0.0
    %546 = vmatpush1.msra.mxu0 0.0
    %547 = vmatprep.subr.mxu0 0.0
    %548 = vmatpush1.msra.mxu0 0.0
    %549 = vmatprep.subr.mxu0 0.0
    %550 = vmatpush1.msra.mxu0 0.0
    %551 = vmatprep.subr.mxu0 0.0
    %552 = vmatpush1.msra.mxu0 0.0
    %553 = vmatprep.subr.mxu0 0.0
    %554 = vmatpush1.msra.mxu0 0.0
    %555 = vmatprep.subr.mxu0 0.0
    %556 = vmatpush1.msra.mxu0 0.0
    %557 = vmatprep.subr.mxu0 0.0
    %558 = vmatpush1.msra.mxu0 0.0
    %559 = vmatprep.subr.mxu0 0.0
    %560 = vmatpush1.msra.mxu0 0.0
    %561 = vmatprep.subr.mxu0 0.0
    %562 = vmatpush1.msra.mxu0 0.0
    %563 = vmatprep.subr.mxu0 0.0
    %564 = vmatpush1.msra.mxu0 0.0
    %565 = vmatprep.subr.mxu0 0.0
    %566 = vmatpush1.msra.mxu0 0.0
    %567 = vmatprep.mubr.f32.mxu0 0.0
    %568 = vmatmul.mubr.f32.gmra.mrb[0].mxu0 %v501
    %v569 = vpop.f32.mrb[0].mxu0
    %v570 = vadd.f32 0.0, %v569
    %v571 = vpop.f32.mrb[0].mxu0
    %572 = vdwg.mxu0
    %v573 = vadd.f32 %v153, %v570
    %v574 = vxor.u32 %v573, 2147483648
    %v575 = vmul.f32 %v574, 1.442695
    %v576 = vpow.pop %v575
    %v577 = vadd.f32 %v576, 1.0
    %v578 = vrcp.pop %v577
    %v579 = vmul.f32 1.0, %v578
    %v580 = vtanh.pop %v573
    %v582 = vrot.slane %v490, 6
    %v584 = vmul.f32 %v579, %v582
    %586 = vrot.lane.b32.xlu0 %v580, 64
    %v587 = vpop.permute.xlu0 %586
    %v589 = vmul.f32 %v579, %v587
    %591 = vrot.lane.b32.xlu0 %v589, 32
    %v592 = vpop.permute.xlu0 %591
    %v594 = vadd.f32 %v584, %v592
    %v595 = vtanh.pop %v594
    %597 = vrot.lane.b32.xlu0 %v595, 64
    %v598 = vpop.permute.xlu0 %597
    %v600 = vmul.f32 %v579, %v598
    %602 = vrot.lane.b32.xlu0 %v600, 32
    %v603 = vpop.permute.xlu0 %602
    %v604 = vsel %vm177, %v603, 0
    %606 = vmatprep.subr.mxu0 0.0
    %607 = vmatpush1.msra.mxu0 %v57
    %608 = vmatprep.subr.mxu0 0.0
    %609 = vmatpush1.msra.mxu0 %v58
    %610 = vmatprep.subr.mxu0 0.0
    %611 = vmatpush1.msra.mxu0 %v59
    %612 = vmatprep.subr.mxu0 0.0
    %613 = vmatpush1.msra.mxu0 %v60
    %614 = vmatprep.subr.mxu0 0.0
    %615 = vmatpush1.msra.mxu0 0.0
    %616 = vmatprep.subr.mxu0 0.0
    %617 = vmatpush1.msra.mxu0 0.0
    %618 = vmatprep.subr.mxu0 0.0
    %619 = vmatpush1.msra.mxu0 0.0
    %620 = vmatprep.subr.mxu0 0.0
    %621 = vmatpush1.msra.mxu0 0.0
    %622 = vmatprep.subr.mxu0 0.0
    %623 = vmatpush1.msra.mxu0 0.0
    %624 = vmatprep.subr.mxu0 0.0
    %625 = vmatpush1.msra.mxu0 0.0
    %626 = vmatprep.subr.mxu0 0.0
    %627 = vmatpush1.msra.mxu0 0.0
    %628 = vmatprep.subr.mxu0 0.0
    %629 = vmatpush1.msra.mxu0 0.0
    %630 = vmatprep.subr.mxu0 0.0
    %631 = vmatpush1.msra.mxu0 0.0
    %632 = vmatprep.subr.mxu0 0.0
    %633 = vmatpush1.msra.mxu0 0.0
    %634 = vmatprep.subr.mxu0 0.0
    %635 = vmatpush1.msra.mxu0 0.0
    %636 = vmatprep.subr.mxu0 0.0
    %637 = vmatpush1.msra.mxu0 0.0
    %638 = vmatprep.subr.mxu0 0.0
    %639 = vmatpush1.msra.mxu0 0.0
    %640 = vmatprep.subr.mxu0 0.0
    %641 = vmatpush1.msra.mxu0 0.0
    %642 = vmatprep.subr.mxu0 0.0
    %643 = vmatpush1.msra.mxu0 0.0
    %644 = vmatprep.subr.mxu0 0.0
    %645 = vmatpush1.msra.mxu0 0.0
    %646 = vmatprep.subr.mxu0 0.0
    %647 = vmatpush1.msra.mxu0 0.0
    %648 = vmatprep.subr.mxu0 0.0
    %649 = vmatpush1.msra.mxu0 0.0
    %650 = vmatprep.subr.mxu0 0.0
    %651 = vmatpush1.msra.mxu0 0.0
    %652 = vmatprep.subr.mxu0 0.0
    %653 = vmatpush1.msra.mxu0 0.0
    %654 = vmatprep.subr.mxu0 0.0
    %655 = vmatpush1.msra.mxu0 0.0
    %656 = vmatprep.subr.mxu0 0.0
    %657 = vmatpush1.msra.mxu0 0.0
    %658 = vmatprep.subr.mxu0 0.0
    %659 = vmatpush1.msra.mxu0 0.0
    %660 = vmatprep.subr.mxu0 0.0
    %661 = vmatpush1.msra.mxu0 0.0
    %662 = vmatprep.subr.mxu0 0.0
    %663 = vmatpush1.msra.mxu0 0.0
    %664 = vmatprep.subr.mxu0 0.0
    %665 = vmatpush1.msra.mxu0 0.0
    %666 = vmatprep.subr.mxu0 0.0
    %667 = vmatpush1.msra.mxu0 0.0
    %668 = vmatprep.subr.mxu0 0.0
    %669 = vmatpush1.msra.mxu0 0.0
    %670 = vmatprep.mubr.f32.mxu0 0.0
    %671 = vmatmul.mubr.f32.gmra.mrb[0].mxu0 %v604
    %v672 = vpop.f32.mrb[0].mxu0
    %v673 = vadd.f32 0.0, %v672
    %v674 = vpop.f32.mrb[0].mxu0
    %675 = vdwg.mxu0
    %v677 = vrot.slane %v673, 6
    %v679 = vadd.f32 %v153, %v677
    %v680 = vxor.u32 %v679, 2147483648
    %v681 = vmul.f32 %v680, 1.442695
    %v682 = vpow.pop %v681
    %v683 = vadd.f32 %v682, 1.0
    %v684 = vrcp.pop %v683
    %v685 = vmul.f32 1.0, %v684
    %v686 = vtanh.pop %v679
    %v688 = vrot.slane %v594, 6
    %v690 = vmul.f32 %v685, %v688
    %692 = vrot.lane.b32.xlu0 %v686, 64
    %v693 = vpop.permute.xlu0 %692
    %v695 = vmul.f32 %v685, %v693
    %697 = vrot.lane.b32.xlu0 %v695, 32
    %v698 = vpop.permute.xlu0 %697
    %v700 = vadd.f32 %v690, %v698
    %v701 = vtanh.pop %v700
    %703 = vrot.lane.b32.xlu0 %v701, 64
    %v704 = vpop.permute.xlu0 %703
    %v706 = vmul.f32 %v685, %v704
    %v708 = vrot.slane %v706, 2
    %709 = vrot.lane.b32.xlu0 %v708, 32
    %v710 = vpop.permute.xlu0 %709
    %v711 = vsel %vm177, %v710, 0
    %713 = vmatprep.subr.mxu0 0.0
    %714 = vmatpush1.msra.mxu0 %v57
    %715 = vmatprep.subr.mxu0 0.0
    %716 = vmatpush1.msra.mxu0 %v58
    %717 = vmatprep.subr.mxu0 0.0
    %718 = vmatpush1.msra.mxu0 %v59
    %719 = vmatprep.subr.mxu0 0.0
    %720 = vmatpush1.msra.mxu0 %v60
    %721 = vmatprep.subr.mxu0 0.0
    %722 = vmatpush1.msra.mxu0 0.0
    %723 = vmatprep.subr.mxu0 0.0
    %724 = vmatpush1.msra.mxu0 0.0
    %725 = vmatprep.subr.mxu0 0.0
    %726 = vmatpush1.msra.mxu0 0.0
    %727 = vmatprep.subr.mxu0 0.0
    %728 = vmatpush1.msra.mxu0 0.0
    %729 = vmatprep.subr.mxu0 0.0
    %730 = vmatpush1.msra.mxu0 0.0
    %731 = vmatprep.subr.mxu0 0.0
    %732 = vmatpush1.msra.mxu0 0.0
    %733 = vmatprep.subr.mxu0 0.0
    %734 = vmatpush1.msra.mxu0 0.0
    %735 = vmatprep.subr.mxu0 0.0
    %736 = vmatpush1.msra.mxu0 0.0
    %737 = vmatprep.subr.mxu0 0.0
    %738 = vmatpush1.msra.mxu0 0.0
    %739 = vmatprep.subr.mxu0 0.0
    %740 = vmatpush1.msra.mxu0 0.0
    %741 = vmatprep.subr.mxu0 0.0
    %742 = vmatpush1.msra.mxu0 0.0
    %743 = vmatprep.subr.mxu0 0.0
    %744 = vmatpush1.msra.mxu0 0.0
    %745 = vmatprep.subr.mxu0 0.0
    %746 = vmatpush1.msra.mxu0 0.0
    %747 = vmatprep.subr.mxu0 0.0
    %748 = vmatpush1.msra.mxu0 0.0
    %749 = vmatprep.subr.mxu0 0.0
    %750 = vmatpush1.msra.mxu0 0.0
    %751 = vmatprep.subr.mxu0 0.0
    %752 = vmatpush1.msra.mxu0 0.0
    %753 = vmatprep.subr.mxu0 0.0
    %754 = vmatpush1.msra.mxu0 0.0
    %755 = vmatprep.subr.mxu0 0.0
    %756 = vmatpush1.msra.mxu0 0.0
    %757 = vmatprep.subr.mxu0 0.0
    %758 = vmatpush1.msra.mxu0 0.0
    %759 = vmatprep.subr.mxu0 0.0
    %760 = vmatpush1.msra.mxu0 0.0
    %761 = vmatprep.subr.mxu0 0.0
    %762 = vmatpush1.msra.mxu0 0.0
    %763 = vmatprep.subr.mxu0 0.0
    %764 = vmatpush1.msra.mxu0 0.0
    %765 = vmatprep.subr.mxu0 0.0
    %766 = vmatpush1.msra.mxu0 0.0
    %767 = vmatprep.subr.mxu0 0.0
    %768 = vmatpush1.msra.mxu0 0.0
    %769 = vmatprep.subr.mxu0 0.0
    %770 = vmatpush1.msra.mxu0 0.0
    %771 = vmatprep.subr.mxu0 0.0
    %772 = vmatpush1.msra.mxu0 0.0
    %773 = vmatprep.subr.mxu0 0.0
    %774 = vmatpush1.msra.mxu0 0.0
    %775 = vmatprep.subr.mxu0 0.0
    %776 = vmatpush1.msra.mxu0 0.0
    %777 = vmatprep.mubr.f32.mxu0 0.0
    %778 = vmatmul.mubr.f32.gmra.mrb[0].mxu0 %v711
    %v779 = vpop.f32.mrb[0].mxu0
    %v780 = vadd.f32 0.0, %v779
    %v781 = vpop.f32.mrb[0].mxu0
    %782 = vdwg.mxu0
    %v784 = vrot.slane %v780, 4
    %v786 = vadd.f32 %v153, %v784
    %v787 = vxor.u32 %v786, 2147483648
    %v788 = vmul.f32 %v787, 1.442695
    %v789 = vpow.pop %v788
    %v790 = vadd.f32 %v789, 1.0
    %v791 = vrcp.pop %v790
    %v792 = vmul.f32 1.0, %v791
    %v793 = vtanh.pop %v786
    %v795 = vrot.slane %v700, 6
    %v797 = vmul.f32 %v792, %v795
    %799 = vrot.lane.b32.xlu0 %v793, 64
    %v800 = vpop.permute.xlu0 %799
    %v802 = vmul.f32 %v792, %v800
    %804 = vrot.lane.b32.xlu0 %v802, 32
    %v805 = vpop.permute.xlu0 %804
    %v807 = vadd.f32 %v797, %v805
    %v808 = vtanh.pop %v807
    %810 = vrot.lane.b32.xlu0 %v808, 64
    %v811 = vpop.permute.xlu0 %810
    %v813 = vmul.f32 %v792, %v811
    %v815 = vrot.slane %v813, 4
    %816 = vrot.lane.b32.xlu0 %v815, 32
    %v817 = vpop.permute.xlu0 %816
    %v818 = vsel %vm177, %v817, 0
    %820 = vmatprep.subr.mxu0 0.0
    %821 = vmatpush1.msra.mxu0 %v57
    %822 = vmatprep.subr.mxu0 0.0
    %823 = vmatpush1.msra.mxu0 %v58
    %824 = vmatprep.subr.mxu0 0.0
    %825 = vmatpush1.msra.mxu0 %v59
    %826 = vmatprep.subr.mxu0 0.0
    %827 = vmatpush1.msra.mxu0 %v60
    %828 = vmatprep.subr.mxu0 0.0
    %829 = vmatpush1.msra.mxu0 0.0
    %830 = vmatprep.subr.mxu0 0.0
    %831 = vmatpush1.msra.mxu0 0.0
    %832 = vmatprep.subr.mxu0 0.0
    %833 = vmatpush1.msra.mxu0 0.0
    %834 = vmatprep.subr.mxu0 0.0
    %835 = vmatpush1.msra.mxu0 0.0
    %836 = vmatprep.subr.mxu0 0.0
    %837 = vmatpush1.msra.mxu0 0.0
    %838 = vmatprep.subr.mxu0 0.0
    %839 = vmatpush1.msra.mxu0 0.0
    %840 = vmatprep.subr.mxu0 0.0
    %841 = vmatpush1.msra.mxu0 0.0
    %842 = vmatprep.subr.mxu0 0.0
    %843 = vmatpush1.msra.mxu0 0.0
    %844 = vmatprep.subr.mxu0 0.0
    %845 = vmatpush1.msra.mxu0 0.0
    %846 = vmatprep.subr.mxu0 0.0
    %847 = vmatpush1.msra.mxu0 0.0
    %848 = vmatprep.subr.mxu0 0.0
    %849 = vmatpush1.msra.mxu0 0.0
    %850 = vmatprep.subr.mxu0 0.0
    %851 = vmatpush1.msra.mxu0 0.0
    %852 = vmatprep.subr.mxu0 0.0
    %853 = vmatpush1.msra.mxu0 0.0
    %854 = vmatprep.subr.mxu0 0.0
    %855 = vmatpush1.msra.mxu0 0.0
    %856 = vmatprep.subr.mxu0 0.0
    %857 = vmatpush1.msra.mxu0 0.0
    %858 = vmatprep.subr.mxu0 0.0
    %859 = vmatpush1.msra.mxu0 0.0
    %860 = vmatprep.subr.mxu0 0.0
    %861 = vmatpush1.msra.mxu0 0.0
    %862 = vmatprep.subr.mxu0 0.0
    %863 = vmatpush1.msra.mxu0 0.0
    %864 = vmatprep.subr.mxu0 0.0
    %865 = vmatpush1.msra.mxu0 0.0
    %866 = vmatprep.subr.mxu0 0.0
    %867 = vmatpush1.msra.mxu0 0.0
    %868 = vmatprep.subr.mxu0 0.0
    %869 = vmatpush1.msra.mxu0 0.0
    %870 = vmatprep.subr.mxu0 0.0
    %871 = vmatpush1.msra.mxu0 0.0
    %872 = vmatprep.subr.mxu0 0.0
    %873 = vmatpush1.msra.mxu0 0.0
    %874 = vmatprep.subr.mxu0 0.0
    %875 = vmatpush1.msra.mxu0 0.0
    %876 = vmatprep.subr.mxu0 0.0
    %877 = vmatpush1.msra.mxu0 0.0
    %878 = vmatprep.subr.mxu0 0.0
    %879 = vmatpush1.msra.mxu0 0.0
    %880 = vmatprep.subr.mxu0 0.0
    %881 = vmatpush1.msra.mxu0 0.0
    %882 = vmatprep.subr.mxu0 0.0
    %883 = vmatpush1.msra.mxu0 0.0
    %884 = vmatprep.mubr.f32.mxu0 0.0
    %885 = vmatmul.mubr.f32.gmra.mrb[0].mxu0 %v818
    %v886 = vpop.f32.mrb[0].mxu0
    %v887 = vadd.f32 0.0, %v886
    %v888 = vpop.f32.mrb[0].mxu0
    %889 = vdwg.mxu0
    %v891 = vrot.slane %v887, 2
    %v893 = vadd.f32 %v153, %v891
    %v894 = vxor.u32 %v893, 2147483648
    %v895 = vmul.f32 %v894, 1.442695
    %v896 = vpow.pop %v895
    %v897 = vadd.f32 %v896, 1.0
    %v898 = vrcp.pop %v897
    %v899 = vmul.f32 1.0, %v898
    %v900 = vtanh.pop %v893
    %v902 = vrot.slane %v807, 6
    %v904 = vmul.f32 %v899, %v902
    %906 = vrot.lane.b32.xlu0 %v900, 64
    %v907 = vpop.permute.xlu0 %906
    %v909 = vmul.f32 %v899, %v907
    %911 = vrot.lane.b32.xlu0 %v909, 32
    %v912 = vpop.permute.xlu0 %911
    %v914 = vadd.f32 %v904, %v912
    %v915 = vtanh.pop %v914
    %917 = vrot.lane.b32.xlu0 %v915, 64
    %v918 = vpop.permute.xlu0 %917
    %v920 = vmul.f32 %v899, %v918
    %v921 = vld [vmem:[%s4] sm:$0xff]
    %v922 = vld [vmem:[%s4 + $0x8] sm:$0xff]
    %v923 = vld [vmem:[%s4 + $0x10] sm:$0xff]
    %v924 = vld [vmem:[%s4 + $0x18] sm:$0xff]
    %v925 = vld [vmem:[%s5] sm:$0xff]
    %v926 = vld [vmem:[%s5 + $0x8] sm:$0xff]
    %v927 = vld [vmem:[%s5 + $0x10] sm:$0xff]
    %v928 = vld [vmem:[%s5 + $0x18] sm:$0xff]
    %v929 = vld [vmem:[%s6] sm:$0x1]
    %v931 = vlaneseq
    %v932 = vshrl.u32 %v931, 7
    %v933 = vsub.s32 0, %v932
    %v934 = vrot.slane %v929, %v933
    %936 = vmatprep.subr.mxu0 0.0
    %937 = vmatpush1.msra.mxu0 %v921
    %938 = vmatprep.subr.mxu0 0.0
    %939 = vmatpush1.msra.mxu0 %v922
    %940 = vmatprep.subr.mxu0 0.0
    %941 = vmatpush1.msra.mxu0 %v923
    %942 = vmatprep.subr.mxu0 0.0
    %943 = vmatpush1.msra.mxu0 %v924
    %944 = vmatprep.subr.mxu0 0.0
    %945 = vmatpush1.msra.mxu0 0.0
    %946 = vmatprep.subr.mxu0 0.0
    %947 = vmatpush1.msra.mxu0 0.0
    %948 = vmatprep.subr.mxu0 0.0
    %949 = vmatpush1.msra.mxu0 0.0
    %950 = vmatprep.subr.mxu0 0.0
    %951 = vmatpush1.msra.mxu0 0.0
    %952 = vmatprep.subr.mxu0 0.0
    %953 = vmatpush1.msra.mxu0 0.0
    %954 = vmatprep.subr.mxu0 0.0
    %955 = vmatpush1.msra.mxu0 0.0
    %956 = vmatprep.subr.mxu0 0.0
    %957 = vmatpush1.msra.mxu0 0.0
    %958 = vmatprep.subr.mxu0 0.0
    %959 = vmatpush1.msra.mxu0 0.0
    %960 = vmatprep.subr.mxu0 0.0
    %961 = vmatpush1.msra.mxu0 0.0
    %962 = vmatprep.subr.mxu0 0.0
    %963 = vmatpush1.msra.mxu0 0.0
    %964 = vmatprep.subr.mxu0 0.0
    %965 = vmatpush1.msra.mxu0 0.0
    %966 = vmatprep.subr.mxu0 0.0
    %967 = vmatpush1.msra.mxu0 0.0
    %968 = vmatprep.subr.mxu0 0.0
    %969 = vmatpush1.msra.mxu0 0.0
    %970 = vmatprep.subr.mxu0 0.0
    %971 = vmatpush1.msra.mxu0 0.0
    %972 = vmatprep.subr.mxu0 0.0
    %973 = vmatpush1.msra.mxu0 0.0
    %974 = vmatprep.subr.mxu0 0.0
    %975 = vmatpush1.msra.mxu0 0.0
    %976 = vmatprep.subr.mxu0 0.0
    %977 = vmatpush1.msra.mxu0 0.0
    %978 = vmatprep.subr.mxu0 0.0
    %979 = vmatpush1.msra.mxu0 0.0
    %980 = vmatprep.subr.mxu0 0.0
    %981 = vmatpush1.msra.mxu0 0.0
    %982 = vmatprep.subr.mxu0 0.0
    %983 = vmatpush1.msra.mxu0 0.0
    %984 = vmatprep.subr.mxu0 0.0
    %985 = vmatpush1.msra.mxu0 0.0
    %986 = vmatprep.subr.mxu0 0.0
    %987 = vmatpush1.msra.mxu0 0.0
    %988 = vmatprep.subr.mxu0 0.0
    %989 = vmatpush1.msra.mxu0 0.0
    %990 = vmatprep.subr.mxu0 0.0
    %991 = vmatpush1.msra.mxu0 0.0
    %992 = vmatprep.subr.mxu0 0.0
    %993 = vmatpush1.msra.mxu0 0.0
    %994 = vmatprep.subr.mxu0 0.0
    %995 = vmatpush1.msra.mxu0 0.0
    %996 = vmatprep.subr.mxu0 0.0
    %997 = vmatpush1.msra.mxu0 0.0
    %998 = vmatprep.subr.mxu0 0.0
    %999 = vmatpush1.msra.mxu0 0.0
    %1000 = vmatprep.mubr.f32.mxu0 0.0
    %1001 = vmatmul.mubr.f32.gmra.mrb[0].mxu0 %v178
    %v1002 = vpop.f32.mrb[0].mxu0
    %v1003 = vadd.f32 %v934, %v1002
    %v1004 = vpop.f32.mrb[0].mxu0
    %1005 = vdwg.mxu0
    %v1006 = vxor.u32 %v1003, 2147483648
    %v1007 = vmul.f32 %v1006, 1.442695
    %v1008 = vpow.pop %v1007
    %v1009 = vadd.f32 %v1008, 1.0
    %v1010 = vrcp.pop %v1009
    %v1011 = vmul.f32 1.0, %v1010
    %v1012 = vtanh.pop %v1003
    %1014 = vrot.lane.b32.xlu0 %v1012, 64
    %v1015 = vpop.permute.xlu0 %1014
    %v1017 = vmul.f32 %v1011, %v1015
    %v1018 = vtanh.pop %v1017
    %1020 = vrot.lane.b32.xlu0 %v1018, 96
    %v1021 = vpop.permute.xlu0 %1020
    %v1023 = vmul.f32 %v1011, %v1021
    %1024 = vmatprep.subr.mxu0 0.0
    %1025 = vmatpush1.msra.mxu0 %v921
    %1026 = vmatprep.subr.mxu0 0.0
    %1027 = vmatpush1.msra.mxu0 %v922
    %1028 = vmatprep.subr.mxu0 0.0
    %1029 = vmatpush1.msra.mxu0 %v923
    %1030 = vmatprep.subr.mxu0 0.0
    %1031 = vmatpush1.msra.mxu0 %v924
    %1032 = vmatprep.subr.mxu0 0.0
    %1033 = vmatpush1.msra.mxu0 0.0
    %1034 = vmatprep.subr.mxu0 0.0
    %1035 = vmatpush1.msra.mxu0 0.0
    %1036 = vmatprep.subr.mxu0 0.0
    %1037 = vmatpush1.msra.mxu0 0.0
    %1038 = vmatprep.subr.mxu0 0.0
    %1039 = vmatpush1.msra.mxu0 0.0
    %1040 = vmatprep.subr.mxu0 0.0
    %1041 = vmatpush1.msra.mxu0 0.0
    %1042 = vmatprep.subr.mxu0 0.0
    %1043 = vmatpush1.msra.mxu0 0.0
    %1044 = vmatprep.subr.mxu0 0.0
    %1045 = vmatpush1.msra.mxu0 0.0
    %1046 = vmatprep.subr.mxu0 0.0
    %1047 = vmatpush1.msra.mxu0 0.0
    %1048 = vmatprep.subr.mxu0 0.0
    %1049 = vmatpush1.msra.mxu0 0.0
    %1050 = vmatprep.subr.mxu0 0.0
    %1051 = vmatpush1.msra.mxu0 0.0
    %1052 = vmatprep.subr.mxu0 0.0
    %1053 = vmatpush1.msra.mxu0 0.0
    %1054 = vmatprep.subr.mxu0 0.0
    %1055 = vmatpush1.msra.mxu0 0.0
    %1056 = vmatprep.subr.mxu0 0.0
    %1057 = vmatpush1.msra.mxu0 0.0
    %1058 = vmatprep.subr.mxu0 0.0
    %1059 = vmatpush1.msra.mxu0 0.0
    %1060 = vmatprep.subr.mxu0 0.0
    %1061 = vmatpush1.msra.mxu0 0.0
    %1062 = vmatprep.subr.mxu0 0.0
    %1063 = vmatpush1.msra.mxu0 0.0
    %1064 = vmatprep.subr.mxu0 0.0
    %1065 = vmatpush1.msra.mxu0 0.0
    %1066 = vmatprep.subr.mxu0 0.0
    %1067 = vmatpush1.msra.mxu0 0.0
    %1068 = vmatprep.subr.mxu0 0.0
    %1069 = vmatpush1.msra.mxu0 0.0
    %1070 = vmatprep.subr.mxu0 0.0
    %1071 = vmatpush1.msra.mxu0 0.0
    %1072 = vmatprep.subr.mxu0 0.0
    %1073 = vmatpush1.msra.mxu0 0.0
    %1074 = vmatprep.subr.mxu0 0.0
    %1075 = vmatpush1.msra.mxu0 0.0
    %1076 = vmatprep.subr.mxu0 0.0
    %1077 = vmatpush1.msra.mxu0 0.0
    %1078 = vmatprep.subr.mxu0 0.0
    %1079 = vmatpush1.msra.mxu0 0.0
    %1080 = vmatprep.subr.mxu0 0.0
    %1081 = vmatpush1.msra.mxu0 0.0
    %1082 = vmatprep.subr.mxu0 0.0
    %1083 = vmatpush1.msra.mxu0 0.0
    %1084 = vmatprep.subr.mxu0 0.0
    %1085 = vmatpush1.msra.mxu0 0.0
    %1086 = vmatprep.subr.mxu0 0.0
    %1087 = vmatpush1.msra.mxu0 0.0
    %1088 = vmatprep.mubr.f32.mxu0 0.0
    %1089 = vmatmul.mubr.f32.gmra.mrb[0].mxu0 %v287
    %v1090 = vpop.f32.mrb[0].mxu0
    %v1091 = vadd.f32 %v934, %v1090
    %v1092 = vpop.f32.mrb[0].mxu0
    %1093 = vdwg.mxu0
    %1095 = vrot.lane.b32.xlu0 %v1023, 32
    %v1096 = vpop.permute.xlu0 %1095
    %v1097 = vsel %vm177, %v1096, 0
    %1099 = vmatprep.subr.mxu0 0.0
    %1100 = vmatpush1.msra.mxu0 %v925
    %1101 = vmatprep.subr.mxu0 0.0
    %1102 = vmatpush1.msra.mxu0 %v926
    %1103 = vmatprep.subr.mxu0 0.0
    %1104 = vmatpush1.msra.mxu0 %v927
    %1105 = vmatprep.subr.mxu0 0.0
    %1106 = vmatpush1.msra.mxu0 %v928
    %1107 = vmatprep.subr.mxu0 0.0
    %1108 = vmatpush1.msra.mxu0 0.0
    %1109 = vmatprep.subr.mxu0 0.0
    %1110 = vmatpush1.msra.mxu0 0.0
    %1111 = vmatprep.subr.mxu0 0.0
    %1112 = vmatpush1.msra.mxu0 0.0
    %1113 = vmatprep.subr.mxu0 0.0
    %1114 = vmatpush1.msra.mxu0 0.0
    %1115 = vmatprep.subr.mxu0 0.0
    %1116 = vmatpush1.msra.mxu0 0.0
    %1117 = vmatprep.subr.mxu0 0.0
    %1118 = vmatpush1.msra.mxu0 0.0
    %1119 = vmatprep.subr.mxu0 0.0
    %1120 = vmatpush1.msra.mxu0 0.0
    %1121 = vmatprep.subr.mxu0 0.0
    %1122 = vmatpush1.msra.mxu0 0.0
    %1123 = vmatprep.subr.mxu0 0.0
    %1124 = vmatpush1.msra.mxu0 0.0
    %1125 = vmatprep.subr.mxu0 0.0
    %1126 = vmatpush1.msra.mxu0 0.0
    %1127 = vmatprep.subr.mxu0 0.0
    %1128 = vmatpush1.msra.mxu0 0.0
    %1129 = vmatprep.subr.mxu0 0.0
    %1130 = vmatpush1.msra.mxu0 0.0
    %1131 = vmatprep.subr.mxu0 0.0
    %1132 = vmatpush1.msra.mxu0 0.0
    %1133 = vmatprep.subr.mxu0 0.0
    %1134 = vmatpush1.msra.mxu0 0.0
    %1135 = vmatprep.subr.mxu0 0.0
    %1136 = vmatpush1.msra.mxu0 0.0
    %1137 = vmatprep.subr.mxu0 0.0
    %1138 = vmatpush1.msra.mxu0 0.0
    %1139 = vmatprep.subr.mxu0 0.0
    %1140 = vmatpush1.msra.mxu0 0.0
    %1141 = vmatprep.subr.mxu0 0.0
    %1142 = vmatpush1.msra.mxu0 0.0
    %1143 = vmatprep.subr.mxu0 0.0
    %1144 = vmatpush1.msra.mxu0 0.0
    %1145 = vmatprep.subr.mxu0 0.0
    %1146 = vmatpush1.msra.mxu0 0.0
    %1147 = vmatprep.subr.mxu0 0.0
    %1148 = vmatpush1.msra.mxu0 0.0
    %1149 = vmatprep.subr.mxu0 0.0
    %1150 = vmatpush1.msra.mxu0 0.0
    %1151 = vmatprep.subr.mxu0 0.0
    %1152 = vmatpush1.msra.mxu0 0.0
    %1153 = vmatprep.subr.mxu0 0.0
    %1154 = vmatpush1.msra.mxu0 0.0
    %1155 = vmatprep.subr.mxu0 0.0
    %1156 = vmatpush1.msra.mxu0 0.0
    %1157 = vmatprep.subr.mxu0 0.0
    %1158 = vmatpush1.msra.mxu0 0.0
    %1159 = vmatprep.subr.mxu0 0.0
    %1160 = vmatpush1.msra.mxu0 0.0
    %1161 = vmatprep.subr.mxu0 0.0
    %1162 = vmatpush1.msra.mxu0 0.0
    %1163 = vmatprep.mubr.f32.mxu0 0.0
    %1164 = vmatmul.mubr.f32.gmra.mrb[0].mxu0 %v1097
    %v1165 = vpop.f32.mrb[0].mxu0
    %v1166 = vadd.f32 0.0, %v1165
    %v1167 = vpop.f32.mrb[0].mxu0
    %1168 = vdwg.mxu0
    %v1169 = vadd.f32 %v1091, %v1166
    %v1170 = vxor.u32 %v1169, 2147483648
    %v1171 = vmul.f32 %v1170, 1.442695
    %v1172 = vpow.pop %v1171
    %v1173 = vadd.f32 %v1172, 1.0
    %v1174 = vrcp.pop %v1173
    %v1175 = vmul.f32 1.0, %v1174
    %v1176 = vtanh.pop %v1169
    %1178 = vrot.lane.b32.xlu0 %v1017, 32
    %v1179 = vpop.permute.xlu0 %1178
    %v1181 = vmul.f32 %v1175, %v1179
    %1183 = vrot.lane.b32.xlu0 %v1176, 64
    %v1184 = vpop.permute.xlu0 %1183
    %v1186 = vmul.f32 %v1175, %v1184
    %1188 = vrot.lane.b32.xlu0 %v1186, 32
    %v1189 = vpop.permute.xlu0 %1188
    %v1191 = vadd.f32 %v1181, %v1189
    %v1192 = vtanh.pop %v1191
    %1194 = vrot.lane.b32.xlu0 %v1192, 64
    %v1195 = vpop.permute.xlu0 %1194
    %v1197 = vmul.f32 %v1175, %v1195
    %1198 = vmatprep.subr.mxu0 0.0
    %1199 = vmatpush1.msra.mxu0 %v921
    %1200 = vmatprep.subr.mxu0 0.0
    %1201 = vmatpush1.msra.mxu0 %v922
    %1202 = vmatprep.subr.mxu0 0.0
    %1203 = vmatpush1.msra.mxu0 %v923
    %1204 = vmatprep.subr.mxu0 0.0
    %1205 = vmatpush1.msra.mxu0 %v924
    %1206 = vmatprep.subr.mxu0 0.0
    %1207 = vmatpush1.msra.mxu0 0.0
    %1208 = vmatprep.subr.mxu0 0.0
    %1209 = vmatpush1.msra.mxu0 0.0
    %1210 = vmatprep.subr.mxu0 0.0
    %1211 = vmatpush1.msra.mxu0 0.0
    %1212 = vmatprep.subr.mxu0 0.0
    %1213 = vmatpush1.msra.mxu0 0.0
    %1214 = vmatprep.subr.mxu0 0.0
    %1215 = vmatpush1.msra.mxu0 0.0
    %1216 = vmatprep.subr.mxu0 0.0
    %1217 = vmatpush1.msra.mxu0 0.0
    %1218 = vmatprep.subr.mxu0 0.0
    %1219 = vmatpush1.msra.mxu0 0.0
    %1220 = vmatprep.subr.mxu0 0.0
    %1221 = vmatpush1.msra.mxu0 0.0
    %1222 = vmatprep.subr.mxu0 0.0
    %1223 = vmatpush1.msra.mxu0 0.0
    %1224 = vmatprep.subr.mxu0 0.0
    %1225 = vmatpush1.msra.mxu0 0.0
    %1226 = vmatprep.subr.mxu0 0.0
    %1227 = vmatpush1.msra.mxu0 0.0
    %1228 = vmatprep.subr.mxu0 0.0
    %1229 = vmatpush1.msra.mxu0 0.0
    %1230 = vmatprep.subr.mxu0 0.0
    %1231 = vmatpush1.msra.mxu0 0.0
    %1232 = vmatprep.subr.mxu0 0.0
    %1233 = vmatpush1.msra.mxu0 0.0
    %1234 = vmatprep.subr.mxu0 0.0
    %1235 = vmatpush1.msra.mxu0 0.0
    %1236 = vmatprep.subr.mxu0 0.0
    %1237 = vmatpush1.msra.mxu0 0.0
    %1238 = vmatprep.subr.mxu0 0.0
    %1239 = vmatpush1.msra.mxu0 0.0
    %1240 = vmatprep.subr.mxu0 0.0
    %1241 = vmatpush1.msra.mxu0 0.0
    %1242 = vmatprep.subr.mxu0 0.0
    %1243 = vmatpush1.msra.mxu0 0.0
    %1244 = vmatprep.subr.mxu0 0.0
    %1245 = vmatpush1.msra.mxu0 0.0
    %1246 = vmatprep.subr.mxu0 0.0
    %1247 = vmatpush1.msra.mxu0 0.0
    %1248 = vmatprep.subr.mxu0 0.0
    %1249 = vmatpush1.msra.mxu0 0.0
    %1250 = vmatprep.subr.mxu0 0.0
    %1251 = vmatpush1.msra.mxu0 0.0
    %1252 = vmatprep.subr.mxu0 0.0
    %1253 = vmatpush1.msra.mxu0 0.0
    %1254 = vmatprep.subr.mxu0 0.0
    %1255 = vmatpush1.msra.mxu0 0.0
    %1256 = vmatprep.subr.mxu0 0.0
    %1257 = vmatpush1.msra.mxu0 0.0
    %1258 = vmatprep.subr.mxu0 0.0
    %1259 = vmatpush1.msra.mxu0 0.0
    %1260 = vmatprep.subr.mxu0 0.0
    %1261 = vmatpush1.msra.mxu0 0.0
    %1262 = vmatprep.mubr.f32.mxu0 0.0
    %1263 = vmatmul.mubr.f32.gmra.mrb[0].mxu0 %v394
    %v1264 = vpop.f32.mrb[0].mxu0
    %v1265 = vadd.f32 %v934, %v1264
    %v1266 = vpop.f32.mrb[0].mxu0
    %1267 = vdwg.mxu0
    %1269 = vrot.lane.b32.xlu0 %v1197, 32
    %v1270 = vpop.permute.xlu0 %1269
    %v1271 = vsel %vm177, %v1270, 0
    %1273 = vmatprep.subr.mxu0 0.0
    %1274 = vmatpush1.msra.mxu0 %v925
    %1275 = vmatprep.subr.mxu0 0.0
    %1276 = vmatpush1.msra.mxu0 %v926
    %1277 = vmatprep.subr.mxu0 0.0
    %1278 = vmatpush1.msra.mxu0 %v927
    %1279 = vmatprep.subr.mxu0 0.0
    %1280 = vmatpush1.msra.mxu0 %v928
    %1281 = vmatprep.subr.mxu0 0.0
    %1282 = vmatpush1.msra.mxu0 0.0
    %1283 = vmatprep.subr.mxu0 0.0
    %1284 = vmatpush1.msra.mxu0 0.0
    %1285 = vmatprep.subr.mxu0 0.0
    %1286 = vmatpush1.msra.mxu0 0.0
    %1287 = vmatprep.subr.mxu0 0.0
    %1288 = vmatpush1.msra.mxu0 0.0
    %1289 = vmatprep.subr.mxu0 0.0
    %1290 = vmatpush1.msra.mxu0 0.0
    %1291 = vmatprep.subr.mxu0 0.0
    %1292 = vmatpush1.msra.mxu0 0.0
    %1293 = vmatprep.subr.mxu0 0.0
    %1294 = vmatpush1.msra.mxu0 0.0
    %1295 = vmatprep.subr.mxu0 0.0
    %1296 = vmatpush1.msra.mxu0 0.0
    %1297 = vmatprep.subr.mxu0 0.0
    %1298 = vmatpush1.msra.mxu0 0.0
    %1299 = vmatprep.subr.mxu0 0.0
    %1300 = vmatpush1.msra.mxu0 0.0
    %1301 = vmatprep.subr.mxu0 0.0
    %1302 = vmatpush1.msra.mxu0 0.0
    %1303 = vmatprep.subr.mxu0 0.0
    %1304 = vmatpush1.msra.mxu0 0.0
    %1305 = vmatprep.subr.mxu0 0.0
    %1306 = vmatpush1.msra.mxu0 0.0
    %1307 = vmatprep.subr.mxu0 0.0
    %1308 = vmatpush1.msra.mxu0 0.0
    %1309 = vmatprep.subr.mxu0 0.0
    %1310 = vmatpush1.msra.mxu0 0.0
    %1311 = vmatprep.subr.mxu0 0.0
    %1312 = vmatpush1.msra.mxu0 0.0
    %1313 = vmatprep.subr.mxu0 0.0
    %1314 = vmatpush1.msra.mxu0 0.0
    %1315 = vmatprep.subr.mxu0 0.0
    %1316 = vmatpush1.msra.mxu0 0.0
    %1317 = vmatprep.subr.mxu0 0.0
    %1318 = vmatpush1.msra.mxu0 0.0
    %1319 = vmatprep.subr.mxu0 0.0
    %1320 = vmatpush1.msra.mxu0 0.0
    %1321 = vmatprep.subr.mxu0 0.0
    %1322 = vmatpush1.msra.mxu0 0.0
    %1323 = vmatprep.subr.mxu0 0.0
    %1324 = vmatpush1.msra.mxu0 0.0
    %1325 = vmatprep.subr.mxu0 0.0
    %1326 = vmatpush1.msra.mxu0 0.0
    %1327 = vmatprep.subr.mxu0 0.0
    %1328 = vmatpush1.msra.mxu0 0.0
    %1329 = vmatprep.subr.mxu0 0.0
    %1330 = vmatpush1.msra.mxu0 0.0
    %1331 = vmatprep.subr.mxu0 0.0
    %1332 = vmatpush1.msra.mxu0 0.0
    %1333 = vmatprep.subr.mxu0 0.0
    %1334 = vmatpush1.msra.mxu0 0.0
    %1335 = vmatprep.subr.mxu0 0.0
    %1336 = vmatpush1.msra.mxu0 0.0
    %1337 = vmatprep.mubr.f32.mxu0 0.0
    %1338 = vmatmul.mubr.f32.gmra.mrb[0].mxu0 %v1271
    %v1339 = vpop.f32.mrb[0].mxu0
    %v1340 = vadd.f32 0.0, %v1339
    %v1341 = vpop.f32.mrb[0].mxu0
    %1342 = vdwg.mxu0
    %v1343 = vadd.f32 %v1265, %v1340
    %v1344 = vxor.u32 %v1343, 2147483648
    %v1345 = vmul.f32 %v1344, 1.442695
    %v1346 = vpow.pop %v1345
    %v1347 = vadd.f32 %v1346, 1.0
    %v1348 = vrcp.pop %v1347
    %v1349 = vmul.f32 1.0, %v1348
    %v1350 = vtanh.pop %v1343
    %v1351 = vmul.f32 %v1349, %v1191
    %1353 = vrot.lane.b32.xlu0 %v1350, 64
    %v1354 = vpop.permute.xlu0 %1353
    %v1356 = vmul.f32 %v1349, %v1354
    %1358 = vrot.lane.b32.xlu0 %v1356, 32
    %v1359 = vpop.permute.xlu0 %1358
    %v1361 = vadd.f32 %v1351, %v1359
    %v1362 = vtanh.pop %v1361
    %1364 = vrot.lane.b32.xlu0 %v1362, 64
    %v1365 = vpop.permute.xlu0 %1364
    %v1367 = vmul.f32 %v1349, %v1365
    %1368 = vmatprep.subr.mxu0 0.0
    %1369 = vmatpush1.msra.mxu0 %v921
    %1370 = vmatprep.subr.mxu0 0.0
    %1371 = vmatpush1.msra.mxu0 %v922
    %1372 = vmatprep.subr.mxu0 0.0
    %1373 = vmatpush1.msra.mxu0 %v923
    %1374 = vmatprep.subr.mxu0 0.0
    %1375 = vmatpush1.msra.mxu0 %v924
    %1376 = vmatprep.subr.mxu0 0.0
    %1377 = vmatpush1.msra.mxu0 0.0
    %1378 = vmatprep.subr.mxu0 0.0
    %1379 = vmatpush1.msra.mxu0 0.0
    %1380 = vmatprep.subr.mxu0 0.0
    %1381 = vmatpush1.msra.mxu0 0.0
    %1382 = vmatprep.subr.mxu0 0.0
    %1383 = vmatpush1.msra.mxu0 0.0
    %1384 = vmatprep.subr.mxu0 0.0
    %1385 = vmatpush1.msra.mxu0 0.0
    %1386 = vmatprep.subr.mxu0 0.0
    %1387 = vmatpush1.msra.mxu0 0.0
    %1388 = vmatprep.subr.mxu0 0.0
    %1389 = vmatpush1.msra.mxu0 0.0
    %1390 = vmatprep.subr.mxu0 0.0
    %1391 = vmatpush1.msra.mxu0 0.0
    %1392 = vmatprep.subr.mxu0 0.0
    %1393 = vmatpush1.msra.mxu0 0.0
    %1394 = vmatprep.subr.mxu0 0.0
    %1395 = vmatpush1.msra.mxu0 0.0
    %1396 = vmatprep.subr.mxu0 0.0
    %1397 = vmatpush1.msra.mxu0 0.0
    %1398 = vmatprep.subr.mxu0 0.0
    %1399 = vmatpush1.msra.mxu0 0.0
    %1400 = vmatprep.subr.mxu0 0.0
    %1401 = vmatpush1.msra.mxu0 0.0
    %1402 = vmatprep.subr.mxu0 0.0
    %1403 = vmatpush1.msra.mxu0 0.0
    %1404 = vmatprep.subr.mxu0 0.0
    %1405 = vmatpush1.msra.mxu0 0.0
    %1406 = vmatprep.subr.mxu0 0.0
    %1407 = vmatpush1.msra.mxu0 0.0
    %1408 = vmatprep.subr.mxu0 0.0
    %1409 = vmatpush1.msra.mxu0 0.0
    %1410 = vmatprep.subr.mxu0 0.0
    %1411 = vmatpush1.msra.mxu0 0.0
    %1412 = vmatprep.subr.mxu0 0.0
    %1413 = vmatpush1.msra.mxu0 0.0
    %1414 = vmatprep.subr.mxu0 0.0
    %1415 = vmatpush1.msra.mxu0 0.0
    %1416 = vmatprep.subr.mxu0 0.0
    %1417 = vmatpush1.msra.mxu0 0.0
    %1418 = vmatprep.subr.mxu0 0.0
    %1419 = vmatpush1.msra.mxu0 0.0
    %1420 = vmatprep.subr.mxu0 0.0
    %1421 = vmatpush1.msra.mxu0 0.0
    %1422 = vmatprep.subr.mxu0 0.0
    %1423 = vmatpush1.msra.mxu0 0.0
    %1424 = vmatprep.subr.mxu0 0.0
    %1425 = vmatpush1.msra.mxu0 0.0
    %1426 = vmatprep.subr.mxu0 0.0
    %1427 = vmatpush1.msra.mxu0 0.0
    %1428 = vmatprep.subr.mxu0 0.0
    %1429 = vmatpush1.msra.mxu0 0.0
    %1430 = vmatprep.subr.mxu0 0.0
    %1431 = vmatpush1.msra.mxu0 0.0
    %1432 = vmatprep.mubr.f32.mxu0 0.0
    %1433 = vmatmul.mubr.f32.gmra.mrb[0].mxu0 %v501
    %v1434 = vpop.f32.mrb[0].mxu0
    %v1435 = vadd.f32 %v934, %v1434
    %v1436 = vpop.f32.mrb[0].mxu0
    %1437 = vdwg.mxu0
    %1439 = vrot.lane.b32.xlu0 %v1367, 32
    %v1440 = vpop.permute.xlu0 %1439
    %v1441 = vsel %vm177, %v1440, 0
    %1443 = vmatprep.subr.mxu0 0.0
    %1444 = vmatpush1.msra.mxu0 %v925
    %1445 = vmatprep.subr.mxu0 0.0
    %1446 = vmatpush1.msra.mxu0 %v926
    %1447 = vmatprep.subr.mxu0 0.0
    %1448 = vmatpush1.msra.mxu0 %v927
    %1449 = vmatprep.subr.mxu0 0.0
    %1450 = vmatpush1.msra.mxu0 %v928
    %1451 = vmatprep.subr.mxu0 0.0
    %1452 = vmatpush1.msra.mxu0 0.0
    %1453 = vmatprep.subr.mxu0 0.0
    %1454 = vmatpush1.msra.mxu0 0.0
    %1455 = vmatprep.subr.mxu0 0.0
    %1456 = vmatpush1.msra.mxu0 0.0
    %1457 = vmatprep.subr.mxu0 0.0
    %1458 = vmatpush1.msra.mxu0 0.0
    %1459 = vmatprep.subr.mxu0 0.0
    %1460 = vmatpush1.msra.mxu0 0.0
    %1461 = vmatprep.subr.mxu0 0.0
    %1462 = vmatpush1.msra.mxu0 0.0
    %1463 = vmatprep.subr.mxu0 0.0
    %1464 = vmatpush1.msra.mxu0 0.0
    %1465 = vmatprep.subr.mxu0 0.0
    %1466 = vmatpush1.msra.mxu0 0.0
    %1467 = vmatprep.subr.mxu0 0.0
    %1468 = vmatpush1.msra.mxu0 0.0
    %1469 = vmatprep.subr.mxu0 0.0
    %1470 = vmatpush1.msra.mxu0 0.0
    %1471 = vmatprep.subr.mxu0 0.0
    %1472 = vmatpush1.msra.mxu0 0.0
    %1473 = vmatprep.subr.mxu0 0.0
    %1474 = vmatpush1.msra.mxu0 0.0
    %1475 = vmatprep.subr.mxu0 0.0
    %1476 = vmatpush1.msra.mxu0 0.0
    %1477 = vmatprep.subr.mxu0 0.0
    %1478 = vmatpush1.msra.mxu0 0.0
    %1479 = vmatprep.subr.mxu0 0.0
    %1480 = vmatpush1.msra.mxu0 0.0
    %1481 = vmatprep.subr.mxu0 0.0
    %1482 = vmatpush1.msra.mxu0 0.0
    %1483 = vmatprep.subr.mxu0 0.0
    %1484 = vmatpush1.msra.mxu0 0.0
    %1485 = vmatprep.subr.mxu0 0.0
    %1486 = vmatpush1.msra.mxu0 0.0
    %1487 = vmatprep.subr.mxu0 0.0
    %1488 = vmatpush1.msra.mxu0 0.0
    %1489 = vmatprep.subr.mxu0 0.0
    %1490 = vmatpush1.msra.mxu0 0.0
    %1491 = vmatprep.subr.mxu0 0.0
    %1492 = vmatpush1.msra.mxu0 0.0
    %1493 = vmatprep.subr.mxu0 0.0
    %1494 = vmatpush1.msra.mxu0 0.0
    %1495 = vmatprep.subr.mxu0 0.0
    %1496 = vmatpush1.msra.mxu0 0.0
    %1497 = vmatprep.subr.mxu0 0.0
    %1498 = vmatpush1.msra.mxu0 0.0
    %1499 = vmatprep.subr.mxu0 0.0
    %1500 = vmatpush1.msra.mxu0 0.0
    %1501 = vmatprep.subr.mxu0 0.0
    %1502 = vmatpush1.msra.mxu0 0.0
    %1503 = vmatprep.subr.mxu0 0.0
    %1504 = vmatpush1.msra.mxu0 0.0
    %1505 = vmatprep.subr.mxu0 0.0
    %1506 = vmatpush1.msra.mxu0 0.0
    %1507 = vmatprep.mubr.f32.mxu0 0.0
    %1508 = vmatmul.mubr.f32.gmra.mrb[0].mxu0 %v1441
    %v1509 = vpop.f32.mrb[0].mxu0
    %v1510 = vadd.f32 0.0, %v1509
    %v1511 = vpop.f32.mrb[0].mxu0
    %1512 = vdwg.mxu0
    %v1513 = vadd.f32 %v1435, %v1510
    %v1514 = vxor.u32 %v1513, 2147483648
    %v1515 = vmul.f32 %v1514, 1.442695
    %v1516 = vpow.pop %v1515
    %v1517 = vadd.f32 %v1516, 1.0
    %v1518 = vrcp.pop %v1517
    %v1519 = vmul.f32 1.0, %v1518
    %v1520 = vtanh.pop %v1513
    %v1521 = vmul.f32 %v1519, %v1361
    %1523 = vrot.lane.b32.xlu0 %v1520, 64
    %v1524 = vpop.permute.xlu0 %1523
    %v1526 = vmul.f32 %v1519, %v1524
    %1528 = vrot.lane.b32.xlu0 %v1526, 32
    %v1529 = vpop.permute.xlu0 %1528
    %v1531 = vadd.f32 %v1521, %v1529
    %v1532 = vtanh.pop %v1531
    %1534 = vrot.lane.b32.xlu0 %v1532, 64
    %v1535 = vpop.permute.xlu0 %1534
    %v1537 = vmul.f32 %v1519, %v1535
    %1538 = vmatprep.subr.mxu0 0.0
    %1539 = vmatpush1.msra.mxu0 %v921
    %1540 = vmatprep.subr.mxu0 0.0
    %1541 = vmatpush1.msra.mxu0 %v922
    %1542 = vmatprep.subr.mxu0 0.0
    %1543 = vmatpush1.msra.mxu0 %v923
    %1544 = vmatprep.subr.mxu0 0.0
    %1545 = vmatpush1.msra.mxu0 %v924
    %1546 = vmatprep.subr.mxu0 0.0
    %1547 = vmatpush1.msra.mxu0 0.0
    %1548 = vmatprep.subr.mxu0 0.0
    %1549 = vmatpush1.msra.mxu0 0.0
    %1550 = vmatprep.subr.mxu0 0.0
    %1551 = vmatpush1.msra.mxu0 0.0
    %1552 = vmatprep.subr.mxu0 0.0
    %1553 = vmatpush1.msra.mxu0 0.0
    %1554 = vmatprep.subr.mxu0 0.0
    %1555 = vmatpush1.msra.mxu0 0.0
    %1556 = vmatprep.subr.mxu0 0.0
    %1557 = vmatpush1.msra.mxu0 0.0
    %1558 = vmatprep.subr.mxu0 0.0
    %1559 = vmatpush1.msra.mxu0 0.0
    %1560 = vmatprep.subr.mxu0 0.0
    %1561 = vmatpush1.msra.mxu0 0.0
    %1562 = vmatprep.subr.mxu0 0.0
    %1563 = vmatpush1.msra.mxu0 0.0
    %1564 = vmatprep.subr.mxu0 0.0
    %1565 = vmatpush1.msra.mxu0 0.0
    %1566 = vmatprep.subr.mxu0 0.0
    %1567 = vmatpush1.msra.mxu0 0.0
    %1568 = vmatprep.subr.mxu0 0.0
    %1569 = vmatpush1.msra.mxu0 0.0
    %1570 = vmatprep.subr.mxu0 0.0
    %1571 = vmatpush1.msra.mxu0 0.0
    %1572 = vmatprep.subr.mxu0 0.0
    %1573 = vmatpush1.msra.mxu0 0.0
    %1574 = vmatprep.subr.mxu0 0.0
    %1575 = vmatpush1.msra.mxu0 0.0
    %1576 = vmatprep.subr.mxu0 0.0
    %1577 = vmatpush1.msra.mxu0 0.0
    %1578 = vmatprep.subr.mxu0 0.0
    %1579 = vmatpush1.msra.mxu0 0.0
    %1580 = vmatprep.subr.mxu0 0.0
    %1581 = vmatpush1.msra.mxu0 0.0
    %1582 = vmatprep.subr.mxu0 0.0
    %1583 = vmatpush1.msra.mxu0 0.0
    %1584 = vmatprep.subr.mxu0 0.0
    %1585 = vmatpush1.msra.mxu0 0.0
    %1586 = vmatprep.subr.mxu0 0.0
    %1587 = vmatpush1.msra.mxu0 0.0
    %1588 = vmatprep.subr.mxu0 0.0
    %1589 = vmatpush1.msra.mxu0 0.0
    %1590 = vmatprep.subr.mxu0 0.0
    %1591 = vmatpush1.msra.mxu0 0.0
    %1592 = vmatprep.subr.mxu0 0.0
    %1593 = vmatpush1.msra.mxu0 0.0
    %1594 = vmatprep.subr.mxu0 0.0
    %1595 = vmatpush1.msra.mxu0 0.0
    %1596 = vmatprep.subr.mxu0 0.0
    %1597 = vmatpush1.msra.mxu0 0.0
    %1598 = vmatprep.subr.mxu0 0.0
    %1599 = vmatpush1.msra.mxu0 0.0
    %1600 = vmatprep.subr.mxu0 0.0
    %1601 = vmatpush1.msra.mxu0 0.0
    %1602 = vmatprep.mubr.f32.mxu0 0.0
    %1603 = vmatmul.mubr.f32.gmra.mrb[0].mxu0 %v604
    %v1604 = vpop.f32.mrb[0].mxu0
    %v1605 = vadd.f32 %v934, %v1604
    %v1606 = vpop.f32.mrb[0].mxu0
    %1607 = vdwg.mxu0
    %1609 = vrot.lane.b32.xlu0 %v1537, 32
    %v1610 = vpop.permute.xlu0 %1609
    %v1611 = vsel %vm177, %v1610, 0
    %1613 = vmatprep.subr.mxu0 0.0
    %1614 = vmatpush1.msra.mxu0 %v925
    %1615 = vmatprep.subr.mxu0 0.0
    %1616 = vmatpush1.msra.mxu0 %v926
    %1617 = vmatprep.subr.mxu0 0.0
    %1618 = vmatpush1.msra.mxu0 %v927
    %1619 = vmatprep.subr.mxu0 0.0
    %1620 = vmatpush1.msra.mxu0 %v928
    %1621 = vmatprep.subr.mxu0 0.0
    %1622 = vmatpush1.msra.mxu0 0.0
    %1623 = vmatprep.subr.mxu0 0.0
    %1624 = vmatpush1.msra.mxu0 0.0
    %1625 = vmatprep.subr.mxu0 0.0
    %1626 = vmatpush1.msra.mxu0 0.0
    %1627 = vmatprep.subr.mxu0 0.0
    %1628 = vmatpush1.msra.mxu0 0.0
    %1629 = vmatprep.subr.mxu0 0.0
    %1630 = vmatpush1.msra.mxu0 0.0
    %1631 = vmatprep.subr.mxu0 0.0
    %1632 = vmatpush1.msra.mxu0 0.0
    %1633 = vmatprep.subr.mxu0 0.0
    %1634 = vmatpush1.msra.mxu0 0.0
    %1635 = vmatprep.subr.mxu0 0.0
    %1636 = vmatpush1.msra.mxu0 0.0
    %1637 = vmatprep.subr.mxu0 0.0
    %1638 = vmatpush1.msra.mxu0 0.0
    %1639 = vmatprep.subr.mxu0 0.0
    %1640 = vmatpush1.msra.mxu0 0.0
    %1641 = vmatprep.subr.mxu0 0.0
    %1642 = vmatpush1.msra.mxu0 0.0
    %1643 = vmatprep.subr.mxu0 0.0
    %1644 = vmatpush1.msra.mxu0 0.0
    %1645 = vmatprep.subr.mxu0 0.0
    %1646 = vmatpush1.msra.mxu0 0.0
    %1647 = vmatprep.subr.mxu0 0.0
    %1648 = vmatpush1.msra.mxu0 0.0
    %1649 = vmatprep.subr.mxu0 0.0
    %1650 = vmatpush1.msra.mxu0 0.0
    %1651 = vmatprep.subr.mxu0 0.0
    %1652 = vmatpush1.msra.mxu0 0.0
    %1653 = vmatprep.subr.mxu0 0.0
    %1654 = vmatpush1.msra.mxu0 0.0
    %1655 = vmatprep.subr.mxu0 0.0
    %1656 = vmatpush1.msra.mxu0 0.0
    %1657 = vmatprep.subr.mxu0 0.0
    %1658 = vmatpush1.msra.mxu0 0.0
    %1659 = vmatprep.subr.mxu0 0.0
    %1660 = vmatpush1.msra.mxu0 0.0
    %1661 = vmatprep.subr.mxu0 0.0
    %1662 = vmatpush1.msra.mxu0 0.0
    %1663 = vmatprep.subr.mxu0 0.0
    %1664 = vmatpush1.msra.mxu0 0.0
    %1665 = vmatprep.subr.mxu0 0.0
    %1666 = vmatpush1.msra.mxu0 0.0
    %1667 = vmatprep.subr.mxu0 0.0
    %1668 = vmatpush1.msra.mxu0 0.0
    %1669 = vmatprep.subr.mxu0 0.0
    %1670 = vmatpush1.msra.mxu0 0.0
    %1671 = vmatprep.subr.mxu0 0.0
    %1672 = vmatpush1.msra.mxu0 0.0
    %1673 = vmatprep.subr.mxu0 0.0
    %1674 = vmatpush1.msra.mxu0 0.0
    %1675 = vmatprep.subr.mxu0 0.0
    %1676 = vmatpush1.msra.mxu0 0.0
    %1677 = vmatprep.mubr.f32.mxu0 0.0
    %1678 = vmatmul.mubr.f32.gmra.mrb[0].mxu0 %v1611
    %v1679 = vpop.f32.mrb[0].mxu0
    %v1680 = vadd.f32 0.0, %v1679
    %v1681 = vpop.f32.mrb[0].mxu0
    %1682 = vdwg.mxu0
    %v1683 = vadd.f32 %v1605, %v1680
    %v1684 = vxor.u32 %v1683, 2147483648
    %v1685 = vmul.f32 %v1684, 1.442695
    %v1686 = vpow.pop %v1685
    %v1687 = vadd.f32 %v1686, 1.0
    %v1688 = vrcp.pop %v1687
    %v1689 = vmul.f32 1.0, %v1688
    %v1690 = vtanh.pop %v1683
    %v1691 = vmul.f32 %v1689, %v1531
    %1693 = vrot.lane.b32.xlu0 %v1690, 64
    %v1694 = vpop.permute.xlu0 %1693
    %v1696 = vmul.f32 %v1689, %v1694
    %1698 = vrot.lane.b32.xlu0 %v1696, 32
    %v1699 = vpop.permute.xlu0 %1698
    %v1701 = vadd.f32 %v1691, %v1699
    %v1702 = vtanh.pop %v1701
    %1704 = vrot.lane.b32.xlu0 %v1702, 64
    %v1705 = vpop.permute.xlu0 %1704
    %v1707 = vmul.f32 %v1689, %v1705
    %1708 = vmatprep.subr.mxu0 0.0
    %1709 = vmatpush1.msra.mxu0 %v921
    %1710 = vmatprep.subr.mxu0 0.0
    %1711 = vmatpush1.msra.mxu0 %v922
    %1712 = vmatprep.subr.mxu0 0.0
    %1713 = vmatpush1.msra.mxu0 %v923
    %1714 = vmatprep.subr.mxu0 0.0
    %1715 = vmatpush1.msra.mxu0 %v924
    %1716 = vmatprep.subr.mxu0 0.0
    %1717 = vmatpush1.msra.mxu0 0.0
    %1718 = vmatprep.subr.mxu0 0.0
    %1719 = vmatpush1.msra.mxu0 0.0
    %1720 = vmatprep.subr.mxu0 0.0
    %1721 = vmatpush1.msra.mxu0 0.0
    %1722 = vmatprep.subr.mxu0 0.0
    %1723 = vmatpush1.msra.mxu0 0.0
    %1724 = vmatprep.subr.mxu0 0.0
    %1725 = vmatpush1.msra.mxu0 0.0
    %1726 = vmatprep.subr.mxu0 0.0
    %1727 = vmatpush1.msra.mxu0 0.0
    %1728 = vmatprep.subr.mxu0 0.0
    %1729 = vmatpush1.msra.mxu0 0.0
    %1730 = vmatprep.subr.mxu0 0.0
    %1731 = vmatpush1.msra.mxu0 0.0
    %1732 = vmatprep.subr.mxu0 0.0
    %1733 = vmatpush1.msra.mxu0 0.0
    %1734 = vmatprep.subr.mxu0 0.0
    %1735 = vmatpush1.msra.mxu0 0.0
    %1736 = vmatprep.subr.mxu0 0.0
    %1737 = vmatpush1.msra.mxu0 0.0
    %1738 = vmatprep.subr.mxu0 0.0
    %1739 = vmatpush1.msra.mxu0 0.0
    %1740 = vmatprep.subr.mxu0 0.0
    %1741 = vmatpush1.msra.mxu0 0.0
    %1742 = vmatprep.subr.mxu0 0.0
    %1743 = vmatpush1.msra.mxu0 0.0
    %1744 = vmatprep.subr.mxu0 0.0
    %1745 = vmatpush1.msra.mxu0 0.0
    %1746 = vmatprep.subr.mxu0 0.0
    %1747 = vmatpush1.msra.mxu0 0.0
    %1748 = vmatprep.subr.mxu0 0.0
    %1749 = vmatpush1.msra.mxu0 0.0
    %1750 = vmatprep.subr.mxu0 0.0
    %1751 = vmatpush1.msra.mxu0 0.0
    %1752 = vmatprep.subr.mxu0 0.0
    %1753 = vmatpush1.msra.mxu0 0.0
    %1754 = vmatprep.subr.mxu0 0.0
    %1755 = vmatpush1.msra.mxu0 0.0
    %1756 = vmatprep.subr.mxu0 0.0
    %1757 = vmatpush1.msra.mxu0 0.0
    %1758 = vmatprep.subr.mxu0 0.0
    %1759 = vmatpush1.msra.mxu0 0.0
    %1760 = vmatprep.subr.mxu0 0.0
    %1761 = vmatpush1.msra.mxu0 0.0
    %1762 = vmatprep.subr.mxu0 0.0
    %1763 = vmatpush1.msra.mxu0 0.0
    %1764 = vmatprep.subr.mxu0 0.0
    %1765 = vmatpush1.msra.mxu0 0.0
    %1766 = vmatprep.subr.mxu0 0.0
    %1767 = vmatpush1.msra.mxu0 0.0
    %1768 = vmatprep.subr.mxu0 0.0
    %1769 = vmatpush1.msra.mxu0 0.0
    %1770 = vmatprep.subr.mxu0 0.0
    %1771 = vmatpush1.msra.mxu0 0.0
    %1772 = vmatprep.mubr.f32.mxu0 0.0
    %1773 = vmatmul.mubr.f32.gmra.mrb[0].mxu0 %v711
    %v1774 = vpop.f32.mrb[0].mxu0
    %v1775 = vadd.f32 %v934, %v1774
    %v1776 = vpop.f32.mrb[0].mxu0
    %1777 = vdwg.mxu0
    %1779 = vrot.lane.b32.xlu0 %v1707, 32
    %v1780 = vpop.permute.xlu0 %1779
    %v1781 = vsel %vm177, %v1780, 0
    %1783 = vmatprep.subr.mxu0 0.0
    %1784 = vmatpush1.msra.mxu0 %v925
    %1785 = vmatprep.subr.mxu0 0.0
    %1786 = vmatpush1.msra.mxu0 %v926
    %1787 = vmatprep.subr.mxu0 0.0
    %1788 = vmatpush1.msra.mxu0 %v927
    %1789 = vmatprep.subr.mxu0 0.0
    %1790 = vmatpush1.msra.mxu0 %v928
    %1791 = vmatprep.subr.mxu0 0.0
    %1792 = vmatpush1.msra.mxu0 0.0
    %1793 = vmatprep.subr.mxu0 0.0
    %1794 = vmatpush1.msra.mxu0 0.0
    %1795 = vmatprep.subr.mxu0 0.0
    %1796 = vmatpush1.msra.mxu0 0.0
    %1797 = vmatprep.subr.mxu0 0.0
    %1798 = vmatpush1.msra.mxu0 0.0
    %1799 = vmatprep.subr.mxu0 0.0
    %1800 = vmatpush1.msra.mxu0 0.0
    %1801 = vmatprep.subr.mxu0 0.0
    %1802 = vmatpush1.msra.mxu0 0.0
    %1803 = vmatprep.subr.mxu0 0.0
    %1804 = vmatpush1.msra.mxu0 0.0
    %1805 = vmatprep.subr.mxu0 0.0
    %1806 = vmatpush1.msra.mxu0 0.0
    %1807 = vmatprep.subr.mxu0 0.0
    %1808 = vmatpush1.msra.mxu0 0.0
    %1809 = vmatprep.subr.mxu0 0.0
    %1810 = vmatpush1.msra.mxu0 0.0
    %1811 = vmatprep.subr.mxu0 0.0
    %1812 = vmatpush1.msra.mxu0 0.0
    %1813 = vmatprep.subr.mxu0 0.0
    %1814 = vmatpush1.msra.mxu0 0.0
    %1815 = vmatprep.subr.mxu0 0.0
    %1816 = vmatpush1.msra.mxu0 0.0
    %1817 = vmatprep.subr.mxu0 0.0
    %1818 = vmatpush1.msra.mxu0 0.0
    %1819 = vmatprep.subr.mxu0 0.0
    %1820 = vmatpush1.msra.mxu0 0.0
    %1821 = vmatprep.subr.mxu0 0.0
    %1822 = vmatpush1.msra.mxu0 0.0
    %1823 = vmatprep.subr.mxu0 0.0
    %1824 = vmatpush1.msra.mxu0 0.0
    %1825 = vmatprep.subr.mxu0 0.0
    %1826 = vmatpush1.msra.mxu0 0.0
    %1827 = vmatprep.subr.mxu0 0.0
    %1828 = vmatpush1.msra.mxu0 0.0
    %1829 = vmatprep.subr.mxu0 0.0
    %1830 = vmatpush1.msra.mxu0 0.0
    %1831 = vmatprep.subr.mxu0 0.0
    %1832 = vmatpush1.msra.mxu0 0.0
    %1833 = vmatprep.subr.mxu0 0.0
    %1834 = vmatpush1.msra.mxu0 0.0
    %1835 = vmatprep.subr.mxu0 0.0
    %1836 = vmatpush1.msra.mxu0 0.0
    %1837 = vmatprep.subr.mxu0 0.0
    %1838 = vmatpush1.msra.mxu0 0.0
    %1839 = vmatprep.subr.mxu0 0.0
    %1840 = vmatpush1.msra.mxu0 0.0
    %1841 = vmatprep.subr.mxu0 0.0
    %1842 = vmatpush1.msra.mxu0 0.0
    %1843 = vmatprep.subr.mxu0 0.0
    %1844 = vmatpush1.msra.mxu0 0.0
    %1845 = vmatprep.subr.mxu0 0.0
    %1846 = vmatpush1.msra.mxu0 0.0
    %1847 = vmatprep.mubr.f32.mxu0 0.0
    %1848 = vmatmul.mubr.f32.gmra.mrb[0].mxu0 %v1781
    %v1849 = vpop.f32.mrb[0].mxu0
    %v1850 = vadd.f32 0.0, %v1849
    %v1851 = vpop.f32.mrb[0].mxu0
    %1852 = vdwg.mxu0
    %v1853 = vadd.f32 %v1775, %v1850
    %v1854 = vxor.u32 %v1853, 2147483648
    %v1855 = vmul.f32 %v1854, 1.442695
    %v1856 = vpow.pop %v1855
    %v1857 = vadd.f32 %v1856, 1.0
    %v1858 = vrcp.pop %v1857
    %v1859 = vmul.f32 1.0, %v1858
    %v1860 = vtanh.pop %v1853
    %v1861 = vmul.f32 %v1859, %v1701
    %1863 = vrot.lane.b32.xlu0 %v1860, 64
    %v1864 = vpop.permute.xlu0 %1863
    %v1866 = vmul.f32 %v1859, %v1864
    %1868 = vrot.lane.b32.xlu0 %v1866, 32
    %v1869 = vpop.permute.xlu0 %1868
    %v1871 = vadd.f32 %v1861, %v1869
    %v1872 = vtanh.pop %v1871
    %1874 = vrot.lane.b32.xlu0 %v1872, 64
    %v1875 = vpop.permute.xlu0 %1874
    %v1877 = vmul.f32 %v1859, %v1875
    %1878 = vmatprep.subr.mxu0 0.0
    %1879 = vmatpush1.msra.mxu0 %v921
    %1880 = vmatprep.subr.mxu0 0.0
    %1881 = vmatpush1.msra.mxu0 %v922
    %1882 = vmatprep.subr.mxu0 0.0
    %1883 = vmatpush1.msra.mxu0 %v923
    %1884 = vmatprep.subr.mxu0 0.0
    %1885 = vmatpush1.msra.mxu0 %v924
    %1886 = vmatprep.subr.mxu0 0.0
    %1887 = vmatpush1.msra.mxu0 0.0
    %1888 = vmatprep.subr.mxu0 0.0
    %1889 = vmatpush1.msra.mxu0 0.0
    %1890 = vmatprep.subr.mxu0 0.0
    %1891 = vmatpush1.msra.mxu0 0.0
    %1892 = vmatprep.subr.mxu0 0.0
    %1893 = vmatpush1.msra.mxu0 0.0
    %1894 = vmatprep.subr.mxu0 0.0
    %1895 = vmatpush1.msra.mxu0 0.0
    %1896 = vmatprep.subr.mxu0 0.0
    %1897 = vmatpush1.msra.mxu0 0.0
    %1898 = vmatprep.subr.mxu0 0.0
    %1899 = vmatpush1.msra.mxu0 0.0
    %1900 = vmatprep.subr.mxu0 0.0
    %1901 = vmatpush1.msra.mxu0 0.0
    %1902 = vmatprep.subr.mxu0 0.0
    %1903 = vmatpush1.msra.mxu0 0.0
    %1904 = vmatprep.subr.mxu0 0.0
    %1905 = vmatpush1.msra.mxu0 0.0
    %1906 = vmatprep.subr.mxu0 0.0
    %1907 = vmatpush1.msra.mxu0 0.0
    %1908 = vmatprep.subr.mxu0 0.0
    %1909 = vmatpush1.msra.mxu0 0.0
    %1910 = vmatprep.subr.mxu0 0.0
    %1911 = vmatpush1.msra.mxu0 0.0
    %1912 = vmatprep.subr.mxu0 0.0
    %1913 = vmatpush1.msra.mxu0 0.0
    %1914 = vmatprep.subr.mxu0 0.0
    %1915 = vmatpush1.msra.mxu0 0.0
    %1916 = vmatprep.subr.mxu0 0.0
    %1917 = vmatpush1.msra.mxu0 0.0
    %1918 = vmatprep.subr.mxu0 0.0
    %1919 = vmatpush1.msra.mxu0 0.0
    %1920 = vmatprep.subr.mxu0 0.0
    %1921 = vmatpush1.msra.mxu0 0.0
    %1922 = vmatprep.subr.mxu0 0.0
    %1923 = vmatpush1.msra.mxu0 0.0
    %1924 = vmatprep.subr.mxu0 0.0
    %1925 = vmatpush1.msra.mxu0 0.0
    %1926 = vmatprep.subr.mxu0 0.0
    %1927 = vmatpush1.msra.mxu0 0.0
    %1928 = vmatprep.subr.mxu0 0.0
    %1929 = vmatpush1.msra.mxu0 0.0
    %1930 = vmatprep.subr.mxu0 0.0
    %1931 = vmatpush1.msra.mxu0 0.0
    %1932 = vmatprep.subr.mxu0 0.0
    %1933 = vmatpush1.msra.mxu0 0.0
    %1934 = vmatprep.subr.mxu0 0.0
    %1935 = vmatpush1.msra.mxu0 0.0
    %1936 = vmatprep.subr.mxu0 0.0
    %1937 = vmatpush1.msra.mxu0 0.0
    %1938 = vmatprep.subr.mxu0 0.0
    %1939 = vmatpush1.msra.mxu0 0.0
    %1940 = vmatprep.subr.mxu0 0.0
    %1941 = vmatpush1.msra.mxu0 0.0
    %1942 = vmatprep.mubr.f32.mxu0 0.0
    %1943 = vmatmul.mubr.f32.gmra.mrb[0].mxu0 %v818
    %v1944 = vpop.f32.mrb[0].mxu0
    %v1945 = vadd.f32 %v934, %v1944
    %v1946 = vpop.f32.mrb[0].mxu0
    %1947 = vdwg.mxu0
    %1949 = vrot.lane.b32.xlu0 %v1877, 32
    %v1950 = vpop.permute.xlu0 %1949
    %v1951 = vsel %vm177, %v1950, 0
    %1953 = vmatprep.subr.mxu0 0.0
    %1954 = vmatpush1.msra.mxu0 %v925
    %1955 = vmatprep.subr.mxu0 0.0
    %1956 = vmatpush1.msra.mxu0 %v926
    %1957 = vmatprep.subr.mxu0 0.0
    %1958 = vmatpush1.msra.mxu0 %v927
    %1959 = vmatprep.subr.mxu0 0.0
    %1960 = vmatpush1.msra.mxu0 %v928
    %1961 = vmatprep.subr.mxu0 0.0
    %1962 = vmatpush1.msra.mxu0 0.0
    %1963 = vmatprep.subr.mxu0 0.0
    %1964 = vmatpush1.msra.mxu0 0.0
    %1965 = vmatprep.subr.mxu0 0.0
    %1966 = vmatpush1.msra.mxu0 0.0
    %1967 = vmatprep.subr.mxu0 0.0
    %1968 = vmatpush1.msra.mxu0 0.0
    %1969 = vmatprep.subr.mxu0 0.0
    %1970 = vmatpush1.msra.mxu0 0.0
    %1971 = vmatprep.subr.mxu0 0.0
    %1972 = vmatpush1.msra.mxu0 0.0
    %1973 = vmatprep.subr.mxu0 0.0
    %1974 = vmatpush1.msra.mxu0 0.0
    %1975 = vmatprep.subr.mxu0 0.0
    %1976 = vmatpush1.msra.mxu0 0.0
    %1977 = vmatprep.subr.mxu0 0.0
    %1978 = vmatpush1.msra.mxu0 0.0
    %1979 = vmatprep.subr.mxu0 0.0
    %1980 = vmatpush1.msra.mxu0 0.0
    %1981 = vmatprep.subr.mxu0 0.0
    %1982 = vmatpush1.msra.mxu0 0.0
    %1983 = vmatprep.subr.mxu0 0.0
    %1984 = vmatpush1.msra.mxu0 0.0
    %1985 = vmatprep.subr.mxu0 0.0
    %1986 = vmatpush1.msra.mxu0 0.0
    %1987 = vmatprep.subr.mxu0 0.0
    %1988 = vmatpush1.msra.mxu0 0.0
    %1989 = vmatprep.subr.mxu0 0.0
    %1990 = vmatpush1.msra.mxu0 0.0
    %1991 = vmatprep.subr.mxu0 0.0
    %1992 = vmatpush1.msra.mxu0 0.0
    %1993 = vmatprep.subr.mxu0 0.0
    %1994 = vmatpush1.msra.mxu0 0.0
    %1995 = vmatprep.subr.mxu0 0.0
    %1996 = vmatpush1.msra.mxu0 0.0
    %1997 = vmatprep.subr.mxu0 0.0
    %1998 = vmatpush1.msra.mxu0 0.0
    %1999 = vmatprep.subr.mxu0 0.0
    %2000 = vmatpush1.msra.mxu0 0.0
    %2001 = vmatprep.subr.mxu0 0.0
    %2002 = vmatpush1.msra.mxu0 0.0
    %2003 = vmatprep.subr.mxu0 0.0
    %2004 = vmatpush1.msra.mxu0 0.0
    %2005 = vmatprep.subr.mxu0 0.0
    %2006 = vmatpush1.msra.mxu0 0.0
    %2007 = vmatprep.subr.mxu0 0.0
    %2008 = vmatpush1.msra.mxu0 0.0
    %2009 = vmatprep.subr.mxu0 0.0
    %2010 = vmatpush1.msra.mxu0 0.0
    %2011 = vmatprep.subr.mxu0 0.0
    %2012 = vmatpush1.msra.mxu0 0.0
    %2013 = vmatprep.subr.mxu0 0.0
    %2014 = vmatpush1.msra.mxu0 0.0
    %2015 = vmatprep.subr.mxu0 0.0
    %2016 = vmatpush1.msra.mxu0 0.0
    %2017 = vmatprep.mubr.f32.mxu0 0.0
    %2018 = vmatmul.mubr.f32.gmra.mrb[0].mxu0 %v1951
    %v2019 = vpop.f32.mrb[0].mxu0
    %v2020 = vadd.f32 0.0, %v2019
    %v2021 = vpop.f32.mrb[0].mxu0
    %2022 = vdwg.mxu0
    %v2023 = vadd.f32 %v1945, %v2020
    %v2024 = vxor.u32 %v2023, 2147483648
    %v2025 = vmul.f32 %v2024, 1.442695
    %v2026 = vpow.pop %v2025
    %v2027 = vadd.f32 %v2026, 1.0
    %v2028 = vrcp.pop %v2027
    %v2029 = vmul.f32 1.0, %v2028
    %v2030 = vtanh.pop %v2023
    %v2031 = vmul.f32 %v2029, %v1871
    %2033 = vrot.lane.b32.xlu0 %v2030, 64
    %v2034 = vpop.permute.xlu0 %2033
    %v2036 = vmul.f32 %v2029, %v2034
    %2038 = vrot.lane.b32.xlu0 %v2036, 32
    %v2039 = vpop.permute.xlu0 %2038
    %v2041 = vadd.f32 %v2031, %v2039
    %v2042 = vtanh.pop %v2041
    %2044 = vrot.lane.b32.xlu0 %v2042, 64
    %v2045 = vpop.permute.xlu0 %2044
    %v2047 = vmul.f32 %v2029, %v2045
    %v2049 = vrot.slane %v920, 6
    %2050 = vrot.lane.b32.xlu0 %v2049, 32
    %v2051 = vpop.permute.xlu0 %2050
    %v2052 = vsel %vm177, %v2051, 0
    %2054 = vmatprep.subr.mxu0 0.0
    %2055 = vmatpush1.msra.mxu0 %v921
    %2056 = vmatprep.subr.mxu0 0.0
    %2057 = vmatpush1.msra.mxu0 %v922
    %2058 = vmatprep.subr.mxu0 0.0
    %2059 = vmatpush1.msra.mxu0 %v923
    %2060 = vmatprep.subr.mxu0 0.0
    %2061 = vmatpush1.msra.mxu0 %v924
    %2062 = vmatprep.subr.mxu0 0.0
    %2063 = vmatpush1.msra.mxu0 0.0
    %2064 = vmatprep.subr.mxu0 0.0
    %2065 = vmatpush1.msra.mxu0 0.0
    %2066 = vmatprep.subr.mxu0 0.0
    %2067 = vmatpush1.msra.mxu0 0.0
    %2068 = vmatprep.subr.mxu0 0.0
    %2069 = vmatpush1.msra.mxu0 0.0
    %2070 = vmatprep.subr.mxu0 0.0
    %2071 = vmatpush1.msra.mxu0 0.0
    %2072 = vmatprep.subr.mxu0 0.0
    %2073 = vmatpush1.msra.mxu0 0.0
    %2074 = vmatprep.subr.mxu0 0.0
    %2075 = vmatpush1.msra.mxu0 0.0
    %2076 = vmatprep.subr.mxu0 0.0
    %2077 = vmatpush1.msra.mxu0 0.0
    %2078 = vmatprep.subr.mxu0 0.0
    %2079 = vmatpush1.msra.mxu0 0.0
    %2080 = vmatprep.subr.mxu0 0.0
    %2081 = vmatpush1.msra.mxu0 0.0
    %2082 = vmatprep.subr.mxu0 0.0
    %2083 = vmatpush1.msra.mxu0 0.0
    %2084 = vmatprep.subr.mxu0 0.0
    %2085 = vmatpush1.msra.mxu0 0.0
    %2086 = vmatprep.subr.mxu0 0.0
    %2087 = vmatpush1.msra.mxu0 0.0
    %2088 = vmatprep.subr.mxu0 0.0
    %2089 = vmatpush1.msra.mxu0 0.0
    %2090 = vmatprep.subr.mxu0 0.0
    %2091 = vmatpush1.msra.mxu0 0.0
    %2092 = vmatprep.subr.mxu0 0.0
    %2093 = vmatpush1.msra.mxu0 0.0
    %2094 = vmatprep.subr.mxu0 0.0
    %2095 = vmatpush1.msra.mxu0 0.0
    %2096 = vmatprep.subr.mxu0 0.0
    %2097 = vmatpush1.msra.mxu0 0.0
    %2098 = vmatprep.subr.mxu0 0.0
    %2099 = vmatpush1.msra.mxu0 0.0
    %2100 = vmatprep.subr.mxu0 0.0
    %2101 = vmatpush1.msra.mxu0 0.0
    %2102 = vmatprep.subr.mxu0 0.0
    %2103 = vmatpush1.msra.mxu0 0.0
    %2104 = vmatprep.subr.mxu0 0.0
    %2105 = vmatpush1.msra.mxu0 0.0
    %2106 = vmatprep.subr.mxu0 0.0
    %2107 = vmatpush1.msra.mxu0 0.0
    %2108 = vmatprep.subr.mxu0 0.0
    %2109 = vmatpush1.msra.mxu0 0.0
    %2110 = vmatprep.subr.mxu0 0.0
    %2111 = vmatpush1.msra.mxu0 0.0
    %2112 = vmatprep.subr.mxu0 0.0
    %2113 = vmatpush1.msra.mxu0 0.0
    %2114 = vmatprep.subr.mxu0 0.0
    %2115 = vmatpush1.msra.mxu0 0.0
    %2116 = vmatprep.subr.mxu0 0.0
    %2117 = vmatpush1.msra.mxu0 0.0
    %2118 = vmatprep.mubr.f32.mxu0 0.0
    %2119 = vmatmul.mubr.f32.gmra.mrb[0].mxu0 %v2052
    %v2120 = vpop.f32.mrb[0].mxu0
    %v2121 = vadd.f32 %v934, %v2120
    %v2122 = vpop.f32.mrb[0].mxu0
    %2123 = vdwg.mxu0
    %2125 = vrot.lane.b32.xlu0 %v2047, 32
    %v2126 = vpop.permute.xlu0 %2125
    %v2127 = vsel %vm177, %v2126, 0
    %2129 = vmatprep.subr.mxu0 0.0
    %2130 = vmatpush1.msra.mxu0 %v925
    %2131 = vmatprep.subr.mxu0 0.0
    %2132 = vmatpush1.msra.mxu0 %v926
    %2133 = vmatprep.subr.mxu0 0.0
    %2134 = vmatpush1.msra.mxu0 %v927
    %2135 = vmatprep.subr.mxu0 0.0
    %2136 = vmatpush1.msra.mxu0 %v928
    %2137 = vmatprep.subr.mxu0 0.0
    %2138 = vmatpush1.msra.mxu0 0.0
    %2139 = vmatprep.subr.mxu0 0.0
    %2140 = vmatpush1.msra.mxu0 0.0
    %2141 = vmatprep.subr.mxu0 0.0
    %2142 = vmatpush1.msra.mxu0 0.0
    %2143 = vmatprep.subr.mxu0 0.0
    %2144 = vmatpush1.msra.mxu0 0.0
    %2145 = vmatprep.subr.mxu0 0.0
    %2146 = vmatpush1.msra.mxu0 0.0
    %2147 = vmatprep.subr.mxu0 0.0
    %2148 = vmatpush1.msra.mxu0 0.0
    %2149 = vmatprep.subr.mxu0 0.0
    %2150 = vmatpush1.msra.mxu0 0.0
    %2151 = vmatprep.subr.mxu0 0.0
    %2152 = vmatpush1.msra.mxu0 0.0
    %2153 = vmatprep.subr.mxu0 0.0
    %2154 = vmatpush1.msra.mxu0 0.0
    %2155 = vmatprep.subr.mxu0 0.0
    %2156 = vmatpush1.msra.mxu0 0.0
    %2157 = vmatprep.subr.mxu0 0.0
    %2158 = vmatpush1.msra.mxu0 0.0
    %2159 = vmatprep.subr.mxu0 0.0
    %2160 = vmatpush1.msra.mxu0 0.0
    %2161 = vmatprep.subr.mxu0 0.0
    %2162 = vmatpush1.msra.mxu0 0.0
    %2163 = vmatprep.subr.mxu0 0.0
    %2164 = vmatpush1.msra.mxu0 0.0
    %2165 = vmatprep.subr.mxu0 0.0
    %2166 = vmatpush1.msra.mxu0 0.0
    %2167 = vmatprep.subr.mxu0 0.0
    %2168 = vmatpush1.msra.mxu0 0.0
    %2169 = vmatprep.subr.mxu0 0.0
    %2170 = vmatpush1.msra.mxu0 0.0
    %2171 = vmatprep.subr.mxu0 0.0
    %2172 = vmatpush1.msra.mxu0 0.0
    %2173 = vmatprep.subr.mxu0 0.0
    %2174 = vmatpush1.msra.mxu0 0.0
    %2175 = vmatprep.subr.mxu0 0.0
    %2176 = vmatpush1.msra.mxu0 0.0
    %2177 = vmatprep.subr.mxu0 0.0
    %2178 = vmatpush1.msra.mxu0 0.0
    %2179 = vmatprep.subr.mxu0 0.0
    %2180 = vmatpush1.msra.mxu0 0.0
    %2181 = vmatprep.subr.mxu0 0.0
    %2182 = vmatpush1.msra.mxu0 0.0
    %2183 = vmatprep.subr.mxu0 0.0
    %2184 = vmatpush1.msra.mxu0 0.0
    %2185 = vmatprep.subr.mxu0 0.0
    %2186 = vmatpush1.msra.mxu0 0.0
    %2187 = vmatprep.subr.mxu0 0.0
    %2188 = vmatpush1.msra.mxu0 0.0
    %2189 = vmatprep.subr.mxu0 0.0
    %2190 = vmatpush1.msra.mxu0 0.0
    %2191 = vmatprep.subr.mxu0 0.0
    %2192 = vmatpush1.msra.mxu0 0.0
    %2193 = vmatprep.mubr.f32.mxu0 0.0
    %2194 = vmatmul.mubr.f32.gmra.mrb[0].mxu0 %v2127
    %v2195 = vpop.f32.mrb[0].mxu0
    %v2196 = vadd.f32 0.0, %v2195
    %v2197 = vpop.f32.mrb[0].mxu0
    %2198 = vdwg.mxu0
    %v2199 = vadd.f32 %v2121, %v2196
    %v2200 = vxor.u32 %v2199, 2147483648
    %v2201 = vmul.f32 %v2200, 1.442695
    %v2202 = vpow.pop %v2201
    %v2203 = vadd.f32 %v2202, 1.0
    %v2204 = vrcp.pop %v2203
    %v2205 = vmul.f32 1.0, %v2204
    %v2206 = vtanh.pop %v2199
    %v2207 = vmul.f32 %v2205, %v2041
    %2209 = vrot.lane.b32.xlu0 %v2206, 64
    %v2210 = vpop.permute.xlu0 %2209
    %v2212 = vmul.f32 %v2205, %v2210
    %2214 = vrot.lane.b32.xlu0 %v2212, 32
    %v2215 = vpop.permute.xlu0 %2214
    %v2217 = vadd.f32 %v2207, %v2215
    %v2218 = vtanh.pop %v2217
    %2220 = vrot.lane.b32.xlu0 %v2218, 64
    %v2221 = vpop.permute.xlu0 %2220
    %v2223 = vmul.f32 %v2205, %v2221
    %v2224 = vld [vmem:[%s7] sm:$0xff]
    %v2225 = vld [vmem:[%s7 + $0x8] sm:$0xff]
    %v2226 = vld [vmem:[%s7 + $0x10] sm:$0xff]
    %v2227 = vld [vmem:[%s7 + $0x18] sm:$0xff]
    %v2228 = vld [vmem:[#allocation4] sm:$0x1]
    %v2230 = vlaneseq
    %v2231 = vshrl.u32 %v2230, 7
    %v2232 = vsub.s32 0, %v2231
    %v2233 = vrot.slane %v2228, %v2232
    %2236 = vrot.lane.b32.xlu0 %v2223, 32
    %v2237 = vpop.permute.xlu0 %2236
    %v2238 = vsel %vm177, %v2237, 0
    %2240 = vmatprep.subr.mxu0 0.0
    %2241 = vmatpush1.msra.mxu0 %v2224
    %2242 = vmatprep.subr.mxu0 0.0
    %2243 = vmatpush1.msra.mxu0 %v2225
    %2244 = vmatprep.subr.mxu0 0.0
    %2245 = vmatpush1.msra.mxu0 %v2226
    %2246 = vmatprep.subr.mxu0 0.0
    %2247 = vmatpush1.msra.mxu0 %v2227
    %2248 = vmatprep.subr.mxu0 0.0
    %2249 = vmatpush1.msra.mxu0 0.0
    %2250 = vmatprep.subr.mxu0 0.0
    %2251 = vmatpush1.msra.mxu0 0.0
    %2252 = vmatprep.subr.mxu0 0.0
    %2253 = vmatpush1.msra.mxu0 0.0
    %2254 = vmatprep.subr.mxu0 0.0
    %2255 = vmatpush1.msra.mxu0 0.0
    %2256 = vmatprep.subr.mxu0 0.0
    %2257 = vmatpush1.msra.mxu0 0.0
    %2258 = vmatprep.subr.mxu0 0.0
    %2259 = vmatpush1.msra.mxu0 0.0
    %2260 = vmatprep.subr.mxu0 0.0
    %2261 = vmatpush1.msra.mxu0 0.0
    %2262 = vmatprep.subr.mxu0 0.0
    %2263 = vmatpush1.msra.mxu0 0.0
    %2264 = vmatprep.subr.mxu0 0.0
    %2265 = vmatpush1.msra.mxu0 0.0
    %2266 = vmatprep.subr.mxu0 0.0
    %2267 = vmatpush1.msra.mxu0 0.0
    %2268 = vmatprep.subr.mxu0 0.0
    %2269 = vmatpush1.msra.mxu0 0.0
    %2270 = vmatprep.subr.mxu0 0.0
    %2271 = vmatpush1.msra.mxu0 0.0
    %2272 = vmatprep.subr.mxu0 0.0
    %2273 = vmatpush1.msra.mxu0 0.0
    %2274 = vmatprep.subr.mxu0 0.0
    %2275 = vmatpush1.msra.mxu0 0.0
    %2276 = vmatprep.subr.mxu0 0.0
    %2277 = vmatpush1.msra.mxu0 0.0
    %2278 = vmatprep.subr.mxu0 0.0
    %2279 = vmatpush1.msra.mxu0 0.0
    %2280 = vmatprep.subr.mxu0 0.0
    %2281 = vmatpush1.msra.mxu0 0.0
    %2282 = vmatprep.subr.mxu0 0.0
    %2283 = vmatpush1.msra.mxu0 0.0
    %2284 = vmatprep.subr.mxu0 0.0
    %2285 = vmatpush1.msra.mxu0 0.0
    %2286 = vmatprep.subr.mxu0 0.0
    %2287 = vmatpush1.msra.mxu0 0.0
    %2288 = vmatprep.subr.mxu0 0.0
    %2289 = vmatpush1.msra.mxu0 0.0
    %2290 = vmatprep.subr.mxu0 0.0
    %2291 = vmatpush1.msra.mxu0 0.0
    %2292 = vmatprep.subr.mxu0 0.0
    %2293 = vmatpush1.msra.mxu0 0.0
    %2294 = vmatprep.subr.mxu0 0.0
    %2295 = vmatpush1.msra.mxu0 0.0
    %2296 = vmatprep.subr.mxu0 0.0
    %2297 = vmatpush1.msra.mxu0 0.0
    %2298 = vmatprep.subr.mxu0 0.0
    %2299 = vmatpush1.msra.mxu0 0.0
    %2300 = vmatprep.subr.mxu0 0.0
    %2301 = vmatpush1.msra.mxu0 0.0
    %2302 = vmatprep.subr.mxu0 0.0
    %2303 = vmatpush1.msra.mxu0 0.0
    %2304 = vmatprep.mubr.f32.mxu0 0.0
    %2305 = vmatmul.mubr.f32.gmra.mrb[0].mxu0 %v2238
    %v2306 = vpop.f32.mrb[0].mxu0
    %v2307 = vadd.f32 %v2233, %v2306
    %v2308 = vpop.f32.mrb[0].mxu0
    %2309 = vdwg.mxu0
    %vm2310 = vcmask 123904
    %2311 = vst.msk [vmem:[%s9] sm:$0x3] %vm2310, %v2307
    // Predicated region
    $region46: #{lstm_forward.1} parent=1 // pred_check
      _
    $region47: #{lstm_forward.1} parent=1 // pred_check_branch
      %2313 = sbr.rel (0) target = $region49
    $region48: #{lstm_forward.1} parent=1 // pred_region
      _
    $region49: #{lstm_forward.1} parent=1 // pred_fallthru
      _
    // Predicated region
    $region50: #{lstm_forward.1} parent=1 // pred_check
      _
    $region51: #{lstm_forward.1} parent=1 // pred_check_branch
      %2315 = sbr.rel (0) target = $region53
    $region52: #{lstm_forward.1} parent=1 // pred_region
      _
    $region53: #{lstm_forward.1} parent=1 // pred_fallthru
      _
    %2316 = vsyncpa [#allocation3], 1
    %2317 = vsyncpa [#allocation5], 1

</llo_original>
